<compile_context>
chip_gen: v6e
topology: v6e:2x2x1
jax: 0.10.0
libtpu: 0.0.40
codegen_flags: <defaults>
</compile_context>

<pallas_src>
import functools
import math

import jax
import jax.numpy as jnp
from jax import lax
from jax.experimental import pallas as pl
from jax.experimental.pallas import tpu as pltpu

# ---------------- small synthetic Gemma config ----------------
VOCAB = 256
HIDDEN = 32
INTERMEDIATE = 64
NUM_HEADS = 4
NUM_KV_HEADS = 2          # exercises GQA (num_queries_per_kv = 2)
HEAD_DIM = 16
NUM_LAYERS = 2
MAX_SEQ = 16              # max_position_embeddings
RMS_EPS = 1e-6
ROPE_THETA = 10000.0
MASK_VALUE = -2.3819763e38  # value Gemma uses for masked logits
DTYPE = jnp.bfloat16        # model dtype: bf16 MXU operands, f32 accumulation

Q_SIZE = NUM_HEADS * HEAD_DIM
KV_SIZE = NUM_KV_HEADS * HEAD_DIM
QKV_OUT = Q_SIZE + 2 * KV_SIZE
NQ_PER_KV = NUM_HEADS // NUM_KV_HEADS
SCALE = HEAD_DIM ** -0.5    # query_pre_attn_scalar is None for Gemma-1

_VMEM_LIMIT = 32 * 1024 * 1024
# Gemma-1: no softcapping, no qk-norm, no bias, no quant, GLOBAL attention only.


# ---------------- tiling helpers ----------------
def _pick_row_tile(m, dtype):
    # keep sublane-packing friendly row tiles (>=16 rows for 16-bit dtypes)
    min_rows = 16 if jnp.dtype(dtype).itemsize < 4 else 8
    for t in (256, 128, 64, 32, 16, 8):
        if t < min_rows:
            break
        if m % t == 0:
            return t
    return m


def _pick_col_tile(n):
    # lane-dense output tiles (multiple of 128) whenever possible
    return 128 if n % 128 == 0 else n


# ---------------- Pallas kernels ----------------
def _rmsnorm_matmul_kernel(x_ref, gamma_ref, w_ref, o_ref, *, eps):
    # Fused Gemma RMSNorm (f32 math, (1+w) offset) + normed @ W, W stored [K, N].
    # Requires the contraction dim K to be un-tiled (full feature dim per block).
    x = x_ref[...].astype(jnp.float32)                        # (tm, K)
    var = jnp.mean(x * x, axis=-1, keepdims=True)
    normed = x * lax.rsqrt(var + eps)
    normed = normed * (1.0 + gamma_ref[...].astype(jnp.float32))
    h = normed.astype(w_ref.dtype)                            # bf16 -> MXU
    o = jnp.dot(h, w_ref[...], preferred_element_type=jnp.float32)
    o_ref[...] = o.astype(o_ref.dtype)


def fused_rmsnorm_matmul(x2d, gamma, w_t, *, out_dtype, eps=RMS_EPS):
    """rmsnorm(x) @ w_t, with w_t pre-transposed to [in, out]."""
    m, k = x2d.shape
    k2, n = w_t.shape
    assert k == k2
    tm = _pick_row_tile(m, x2d.dtype)
    tn = _pick_col_tile(n)
    grid = (m // tm, n // tn)
    return pl.pallas_call(
        functools.partial(_rmsnorm_matmul_kernel, eps=eps),
        out_shape=jax.ShapeDtypeStruct((m, n), out_dtype),
        grid=grid,
        in_specs=[
            pl.BlockSpec((tm, k), lambda i, j: (i, 0)),
            pl.BlockSpec((1, k), lambda i, j: (0, 0)),
            pl.BlockSpec((k, tn), lambda i, j: (0, j)),
        ],
        out_specs=pl.BlockSpec((tm, tn), lambda i, j: (i, j)),
        compiler_params=pltpu.CompilerParams(
            dimension_semantics=("parallel", "parallel"),
            vmem_limit_bytes=_VMEM_LIMIT),
    )(x2d, gamma.reshape(1, k), w_t)


def _attn_block_kernel(pos_ref, q_ref, k_ref, v_ref, wo_ref, res_ref, o_ref, *,
                       scale, num_heads, num_kv_heads, head_dim):
    # Per-batch fused attention + o_proj + residual add.
    #   q_ref  : (T, H*D)   post-RoPE queries (heads packed along lanes)
    #   k_ref  : (S, G*D)   KV cache, native layout (no jnp.repeat GQA expansion)
    #   v_ref  : (S, G*D)
    #   pos_ref: (T, 1)     int32 query positions (causal mask built in-kernel)
    #   wo_ref : (H*D, HID) o_proj weight, pre-transposed [in, out]
    #   res_ref: (T, HID)   residual (pre-layernorm hidden states)
    t = q_ref.shape[0]
    s_len = k_ref.shape[0]
    nq_per_kv = num_heads // num_kv_heads

    kv_pos = lax.broadcasted_iota(jnp.int32, (t, s_len), 1)
    mask = jnp.where(kv_pos <= pos_ref[...], 0.0, MASK_VALUE)      # (T, S) f32

    q = q_ref[...]
    k = k_ref[...]
    v = v_ref[...]

    head_outs = []
    for h in range(num_heads):                 # static loop, nq heads share a kv head
        g = h // nq_per_kv
        qh = q[:, h * head_dim:(h + 1) * head_dim]                 # (T, D) bf16
        kg = k[:, g * head_dim:(g + 1) * head_dim]                 # (S, D) bf16
        vg = v[:, g * head_dim:(g + 1) * head_dim]
        scores = lax.dot_general(qh, kg, (((1,), (1,)), ((), ())),
                                 preferred_element_type=jnp.float32)  # (T, S) f32
        scores = scores * scale + mask
        scores = scores - jnp.max(scores, axis=-1, keepdims=True)
        p = jnp.exp(scores)
        p = p / jnp.sum(p, axis=-1, keepdims=True)
        oh = jnp.dot(p.astype(vg.dtype), vg,
                     preferred_element_type=jnp.float32)           # (T, D) f32
        head_outs.append(oh)

    attn = jnp.concatenate(head_outs, axis=-1).astype(wo_ref.dtype)  # (T, H*D) bf16
    out = jnp.dot(attn, wo_ref[...], preferred_element_type=jnp.float32)
    out = out + res_ref[...].astype(jnp.float32)
    o_ref[...] = out.astype(o_ref.dtype)


def attention_block(q_flat, k_flat, v_flat, positions, wo_t, residual):
    b, t, qd = q_flat.shape
    s_len, gd = k_flat.shape[1], k_flat.shape[2]
    hid = residual.shape[-1]
    pos2d = positions.reshape(t, 1).astype(jnp.int32)
    return pl.pallas_call(
        functools.partial(_attn_block_kernel, scale=SCALE, num_heads=NUM_HEADS,
                          num_kv_heads=NUM_KV_HEADS, head_dim=HEAD_DIM),
        out_shape=jax.ShapeDtypeStruct((b, t, hid), residual.dtype),
        grid=(b,),
        in_specs=[
            pl.BlockSpec((t, 1), lambda i: (0, 0)),                # positions (shared)
            pl.BlockSpec((None, t, qd), lambda i: (i, 0, 0)),      # q   (batch squeezed)
            pl.BlockSpec((None, s_len, gd), lambda i: (i, 0, 0)),  # k cache
            pl.BlockSpec((None, s_len, gd), lambda i: (i, 0, 0)),  # v cache
            pl.BlockSpec((qd, hid), lambda i: (0, 0)),             # o_proj^T
            pl.BlockSpec((None, t, hid), lambda i: (i, 0, 0)),     # residual
        ],
        out_specs=pl.BlockSpec((None, t, hid), lambda i: (i, 0, 0)),
        compiler_params=pltpu.CompilerParams(
            dimension_semantics=("parallel",),
            vmem_limit_bytes=_VMEM_LIMIT),
    )(pos2d, q_flat, k_flat, v_flat, wo_t, residual)


def _mlp_block_kernel(x_ref, gamma_ref, wg_ref, wu_ref, wd_ref, o_ref, *, eps):
    # Fused post_attention_layernorm + GemmaMLP (tanh-GELU) + residual add.
    x = x_ref[...].astype(jnp.float32)                        # residual, f32
    var = jnp.mean(x * x, axis=-1, keepdims=True)
    normed = x * lax.rsqrt(var + eps)
    normed = normed * (1.0 + gamma_ref[...].astype(jnp.float32))
    h = normed.astype(wg_ref.dtype)                           # bf16 -> MXU
    gate = jnp.dot(h, wg_ref[...], preferred_element_type=jnp.float32)
    c = math.sqrt(2.0 / math.pi)                              # F.gelu(approximate='tanh')
    gate = 0.5 * gate * (1.0 + jnp.tanh(c * (gate + 0.044715 * gate * gate * gate)))
    up = jnp.dot(h, wu_ref[...], preferred_element_type=jnp.float32)
    inter = (gate * up).astype(wd_ref.dtype)
    down = jnp.dot(inter, wd_ref[...], preferred_element_type=jnp.float32)
    o_ref[...] = (x + down).astype(o_ref.dtype)


def mlp_block(x2d, gamma, wg_t, wu_t, wd_t, *, eps=RMS_EPS):
    m, k = x2d.shape
    inter = wg_t.shape[1]
    tm = _pick_row_tile(m, x2d.dtype)
    grid = (m // tm,)
    return pl.pallas_call(
        functools.partial(_mlp_block_kernel, eps=eps),
        out_shape=jax.ShapeDtypeStruct((m, k), x2d.dtype),
        grid=grid,
        in_specs=[
            pl.BlockSpec((tm, k), lambda i: (i, 0)),
            pl.BlockSpec((1, k), lambda i: (0, 0)),
            pl.BlockSpec((k, inter), lambda i: (0, 0)),
            pl.BlockSpec((k, inter), lambda i: (0, 0)),
            pl.BlockSpec((inter, k), lambda i: (0, 0)),
        ],
        out_specs=pl.BlockSpec((tm, k), lambda i: (i, 0)),
        compiler_params=pltpu.CompilerParams(
            dimension_semantics=("parallel",),
            vmem_limit_bytes=_VMEM_LIMIT),
    )(x2d, gamma.reshape(1, k), wg_t, wu_t, wd_t)


# ---------------- glue: RoPE ----------------
def precompute_freqs_cis(dim, end, theta=10000.0):
    freqs = 1.0 / (theta ** (jnp.arange(0, dim, 2)[: dim // 2].astype(jnp.float32) / dim))
    t = jnp.arange(end, dtype=jnp.float32)
    freqs = jnp.outer(t, freqs)                 # (end, dim//2)
    return jnp.cos(freqs), jnp.sin(freqs)


def apply_rotary_emb(x, cos, sin):
    # x: (B, T, H, D); cos/sin: (T, D//2). Matches torch apply_rotary_emb:
    # first half = real part, second half = imaginary part. f32 math, cast back.
    d = x.shape[-1]
    xf = x.astype(jnp.float32)
    xr, xi = xf[..., : d // 2], xf[..., d // 2:]
    cos_b = cos[None, :, None, :]
    sin_b = sin[None, :, None, :]
    out_r = xr * cos_b - xi * sin_b
    out_i = xr * sin_b + xi * cos_b
    return jnp.concatenate([out_r, out_i], axis=-1).astype(x.dtype)


# ---------------- full forward ----------------
def gemma_forward(params, input_token_ids, input_positions, kv_caches, output_positions):
    B, T = input_token_ids.shape

    # embedding lookup + Gemma sqrt(hidden) normalizer (gather stays in JAX glue)
    hidden_states = jnp.take(params["embedder"], input_token_ids, axis=0)  # (B, T, HID)
    hidden_states = hidden_states * jnp.asarray(HIDDEN ** 0.5, hidden_states.dtype)

    cos = params["rope_cos"][input_positions]
    sin = params["rope_sin"][input_positions]

    # kv_write_indices = input_positions (contiguous in this driver: prefill/decode).
    # TODO(synk): arbitrary non-contiguous kv_write_indices would need a scatter kernel
    #             with input_output_aliases; not needed for the module's usage pattern.
    start = input_positions[0]

    new_kv_caches = []
    for li in range(NUM_LAYERS):
        lp = params["layers"][li]
        k_cache, v_cache = kv_caches[li]

        # --- self-attention block: fused rmsnorm+qkv, RoPE/cache in glue, fused attn+o_proj+res ---
        residual = hidden_states
        qkv = fused_rmsnorm_matmul(hidden_states.reshape(B * T, HIDDEN),
                                   lp["input_layernorm"], lp["qkv_proj_t"],
                                   out_dtype=hidden_states.dtype)
        qkv = qkv.reshape(B, T, QKV_OUT)
        xq = qkv[..., :Q_SIZE].reshape(B, T, NUM_HEADS, HEAD_DIM)
        xk = qkv[..., Q_SIZE:Q_SIZE + KV_SIZE].reshape(B, T, NUM_KV_HEADS, HEAD_DIM)
        xv = qkv[..., Q_SIZE + KV_SIZE:].reshape(B, T, NUM_KV_HEADS, HEAD_DIM)

        xq = apply_rotary_emb(xq, cos, sin)
        xk = apply_rotary_emb(xk, cos, sin)

        # in-place-style KV cache update (only the new tokens are written)
        k_cache = lax.dynamic_update_slice_in_dim(k_cache, xk, start, axis=1)
        v_cache = lax.dynamic_update_slice_in_dim(v_cache, xv, start, axis=1)
        new_kv_caches.append((k_cache, v_cache))

        hidden_states = attention_block(
            xq.reshape(B, T, Q_SIZE),                 # heads packed along lanes
            k_cache.reshape(B, MAX_SEQ, KV_SIZE),     # native cache layout, no repeat
            v_cache.reshape(B, MAX_SEQ, KV_SIZE),
            input_positions, lp["o_proj_t"], residual)

        # --- MLP block: fused rmsnorm + gate/up/down + residual ---
        hidden_states = mlp_block(hidden_states.reshape(B * T, HIDDEN),
                                  lp["post_attention_layernorm"],
                                  lp["gate_proj_t"], lp["up_proj_t"],
                                  lp["down_proj_t"]).reshape(B, T, HIDDEN)

    # --- Sampler (temperatures=None -> greedy argmax branch) ---
    # RMSNorm is per-token, so selecting output_positions before the fused
    # final_norm + logits matmul is equivalent to norm-then-select and cheaper.
    hs_sel = jnp.squeeze(jnp.take(hidden_states, output_positions, axis=1), axis=1)  # (B, HID)
    logits = fused_rmsnorm_matmul(hs_sel, params["final_norm"], params["embedder_t"],
                                  out_dtype=jnp.float32)        # (B, VOCAB), tied embedding
    # final_logit_softcapping is None for Gemma-1 -> no softcap
    next_tokens = jnp.argmax(logits, axis=-1)
    # TODO(synk): stochastic top-p/top-k multinomial sampling path (temperatures != None)
    # is not implemented; greedy branch matches the module exactly.
    return next_tokens, logits, new_kv_caches


# ---------------- deterministic parameter init ----------------
def init_params(key):
    keys = jax.random.split(key, 3 + NUM_LAYERS)

    def rnd(k, shape, scale=0.02):
        return (jax.random.normal(k, shape, jnp.float32) * scale).astype(DTYPE)

    embedder = rnd(keys[0], (VOCAB, HIDDEN))
    cos, sin = precompute_freqs_cis(HEAD_DIM, MAX_SEQ * 2, ROPE_THETA)
    params = {
        "embedder": embedder,                    # (VOCAB, HIDDEN)  for the gather
        "embedder_t": embedder.T,                # (HIDDEN, VOCAB)  lane-dense logits matmul
        "final_norm": rnd(keys[1], (HIDDEN,), 0.1),
        "rope_cos": cos, "rope_sin": sin,
    }
    layers = []
    for li in range(NUM_LAYERS):
        lk = jax.random.split(keys[3 + li], 7)
        # all Linear weights pre-transposed host-side to [in_features, out_features]
        layers.append({
            "qkv_proj_t": rnd(lk[0], (QKV_OUT, HIDDEN)).T,              # (HID, QKV_OUT)
            "o_proj_t": rnd(lk[1], (HIDDEN, Q_SIZE)).T,                 # (Q_SIZE, HID)
            "gate_proj_t": rnd(lk[2], (INTERMEDIATE, HIDDEN)).T,        # (HID, INTER)
            "up_proj_t": rnd(lk[3], (INTERMEDIATE, HIDDEN)).T,          # (HID, INTER)
            "down_proj_t": rnd(lk[4], (HIDDEN, INTERMEDIATE)).T,        # (INTER, HID)
            "input_layernorm": rnd(lk[5], (HIDDEN,), 0.1),
            "post_attention_layernorm": rnd(lk[6], (HIDDEN,), 0.1),
        })
    params["layers"] = layers
    return params


if __name__ == "__main__":
    key = jax.random.PRNGKey(0)
    params = init_params(key)

    B, T = 2, 8
    input_token_ids = jax.random.randint(jax.random.PRNGKey(1), (B, T), 0, VOCAB,
                                         dtype=jnp.int32)
    input_positions = jnp.arange(T, dtype=jnp.int32)
    kv_caches = [
        (jnp.zeros((B, MAX_SEQ, NUM_KV_HEADS, HEAD_DIM), DTYPE),
         jnp.zeros((B, MAX_SEQ, NUM_KV_HEADS, HEAD_DIM), DTYPE))
        for _ in range(NUM_LAYERS)
    ]
    output_positions = jnp.array([T - 1], dtype=jnp.int32)
    # NOTE: the causal attention mask is generated inside the attention kernel from
    # input_positions (equivalent to the (B,1,T,MAX_SEQ) mask the torch driver builds).
    # TODO(synk): externally supplied non-causal masks (e.g. padding) are not plumbed through.

    fwd = jax.jit(gemma_forward)
    next_tokens, logits, kv_caches = fwd(params, input_token_ids, input_positions,
                                         kv_caches, output_positions)
    jax.block_until_ready((next_tokens, logits, kv_caches))
    assert next_tokens.shape == (B,)
    assert logits.shape == (B, VOCAB)
    assert kv_caches[0][0].shape == (B, MAX_SEQ, NUM_KV_HEADS, HEAD_DIM)
    print("KERNEL_OK")
</pallas_src>

<mosaic_0001>
module attributes {stable_mosaic.version = 11 : i64} {
  func.func @_rmsnorm_matmul_kernel(%arg0: i32, %arg1: i32, %arg2: memref<16x32xbf16, #tpu.memory_space<vmem>>, %arg3: memref<1x32xbf16, #tpu.memory_space<vmem>>, %arg4: memref<32x128xbf16, #tpu.memory_space<vmem>>, %arg5: memref<16x128xbf16, #tpu.memory_space<vmem>>) attributes {dimension_semantics = [#tpu.dimension_semantics<parallel>, #tpu.dimension_semantics<parallel>], iteration_bounds = array<i64: 1, 1>, scalar_prefetch = 0 : i64, scratch_operands = 0 : i64, tpu.core_type = #tpu.core_type<tc>, window_params = [{transform_indices = @transform_0, window_bounds = array<i64: 16, 32>}, {pipeline_mode = #tpu.pipeline_mode<synchronous>, transform_indices = @transform_1, window_bounds = array<i64: 1, 32>}, {transform_indices = @transform_2, window_bounds = array<i64: 32, 128>}, {transform_indices = @transform_3, window_bounds = array<i64: 16, 128>}]} {
    %c0 = arith.constant 0 : index
    %c0_0 = arith.constant 0 : index
    %0 = vector.load %arg2[%c0, %c0_0] : memref<16x32xbf16, #tpu.memory_space<vmem>>, vector<16x32xbf16>
    %1 = arith.extf %0 : vector<16x32xbf16> to vector<16x32xf32>
    %2 = arith.mulf %1, %1 : vector<16x32xf32>
    %cst = arith.constant dense<0.000000e+00> : vector<16xf32>
    %3 = vector.multi_reduction <add>, %2, %cst [1] : vector<16x32xf32> to vector<16xf32>
    %4 = vector.shape_cast %3 : vector<16xf32> to vector<16x1xf32>
    %cst_1 = arith.constant 3.200000e+01 : f32
    %5 = vector.broadcast %cst_1 : f32 to vector<16x1xf32>
    %6 = arith.divf %4, %5 : vector<16x1xf32>
    %cst_2 = arith.constant 9.99999997E-7 : f32
    %7 = vector.broadcast %cst_2 : f32 to vector<16x1xf32>
    %8 = arith.addf %6, %7 : vector<16x1xf32>
    %9 = math.rsqrt %8 : vector<16x1xf32>
    %10 = vector.broadcast %9 : vector<16x1xf32> to vector<16x32xf32>
    %11 = arith.mulf %1, %10 : vector<16x32xf32>
    %c0_3 = arith.constant 0 : index
    %c0_4 = arith.constant 0 : index
    %12 = vector.load %arg3[%c0_3, %c0_4] : memref<1x32xbf16, #tpu.memory_space<vmem>>, vector<1x32xbf16>
    %13 = arith.extf %12 : vector<1x32xbf16> to vector<1x32xf32>
    %cst_5 = arith.constant 1.000000e+00 : f32
    %14 = vector.broadcast %cst_5 : f32 to vector<1x32xf32>
    %15 = arith.addf %14, %13 : vector<1x32xf32>
    %16 = vector.broadcast %15 : vector<1x32xf32> to vector<16x32xf32>
    %17 = arith.mulf %11, %16 : vector<16x32xf32>
    %18 = arith.truncf %17 : vector<16x32xf32> to vector<16x32xbf16>
    %c0_6 = arith.constant 0 : index
    %c0_7 = arith.constant 0 : index
    %19 = vector.load %arg4[%c0_6, %c0_7] : memref<32x128xbf16, #tpu.memory_space<vmem>>, vector<32x128xbf16>
    %cst_8 = arith.constant dense<0.000000e+00> : vector<16x128xf32>
    %20 = tpu.matmul %18, %19, %cst_8 {dimension_numbers = #tpu.dot_dimension_numbers<[1], [0], [0], [1], [0, 0, 1, 1], [], []>} : vector<16x32xbf16>, vector<32x128xbf16>, vector<16x128xf32> -> vector<16x128xf32>
    %21 = arith.truncf %20 : vector<16x128xf32> to vector<16x128xbf16>
    %c0_9 = arith.constant 0 : index
    %c0_10 = arith.constant 0 : index
    %22 = vector.load %arg5[%c0_9, %c0_10] : memref<16x128xbf16, #tpu.memory_space<vmem>>, vector<16x128xbf16>
    tpu.vector_store %arg5[%c0_9, %c0_10], %21 {strides = array<i32>} : memref<16x128xbf16, #tpu.memory_space<vmem>>, vector<16x128xbf16>,
    return
  }
  func.func @transform_0(%arg0: i32, %arg1: i32) -> (i32, i32) {
    %c0_i32 = arith.constant 0 : i32
    %c0_i32_0 = arith.constant 0 : i32
    return %arg0, %c0_i32 : i32, i32
  }
  func.func @transform_1(%arg0: i32, %arg1: i32) -> (i32, i32) {
    %c0_i32 = arith.constant 0 : i32
    %c0_i32_0 = arith.constant 0 : i32
    %c0_i32_1 = arith.constant 0 : i32
    return %c0_i32, %c0_i32_0 : i32, i32
  }
  func.func @transform_2(%arg0: i32, %arg1: i32) -> (i32, i32) {
    %c0_i32 = arith.constant 0 : i32
    %c0_i32_0 = arith.constant 0 : i32
    return %c0_i32, %arg1 : i32, i32
  }
  func.func @transform_3(%arg0: i32, %arg1: i32) -> (i32, i32) {
    %c0_i32 = arith.constant 0 : i32
    return %arg0, %arg1 : i32, i32
  }
}

module attributes {stable_mosaic.version = 11 : i64} {
  func.func @_mlp_block_kernel(%arg0: i32, %arg1: memref<16x32xbf16, #tpu.memory_space<vmem>>, %arg2: memref<1x32xbf16, #tpu.memory_space<vmem>>, %arg3: memref<32x64xbf16, #tpu.memory_space<vmem>>, %arg4: memref<32x64xbf16, #tpu.memory_space<vmem>>, %arg5: memref<64x32xbf16, #tpu.memory_space<vmem>>, %arg6: memref<16x32xbf16, #tpu.memory_space<vmem>>) attributes {dimension_semantics = [#tpu.dimension_semantics<parallel>], iteration_bounds = array<i64: 1>, scalar_prefetch = 0 : i64, scratch_operands = 0 : i64, tpu.core_type = #tpu.core_type<tc>, window_params = [{transform_indices = @transform_0, window_bounds = array<i64: 16, 32>}, {pipeline_mode = #tpu.pipeline_mode<synchronous>, transform_indices = @transform_1, window_bounds = array<i64: 1, 32>}, {pipeline_mode = #tpu.pipeline_mode<synchronous>, transform_indices = @transform_2, window_bounds = array<i64: 32, 64>}, {pipeline_mode = #tpu.pipeline_mode<synchronous>, transform_indices = @transform_3, window_bounds = array<i64: 32, 64>}, {pipeline_mode = #tpu.pipeline_mode<synchronous>, transform_indices = @transform_4, window_bounds = array<i64: 64, 32>}, {transform_indices = @transform_5, window_bounds = array<i64: 16, 32>}]} {
    %c0 = arith.constant 0 : index
    %c0_0 = arith.constant 0 : index
    %0 = vector.load %arg1[%c0, %c0_0] : memref<16x32xbf16, #tpu.memory_space<vmem>>, vector<16x32xbf16>
    %1 = arith.extf %0 : vector<16x32xbf16> to vector<16x32xf32>
    %2 = arith.mulf %1, %1 : vector<16x32xf32>
    %cst = arith.constant dense<0.000000e+00> : vector<16xf32>
    %3 = vector.multi_reduction <add>, %2, %cst [1] : vector<16x32xf32> to vector<16xf32>
    %4 = vector.shape_cast %3 : vector<16xf32> to vector<16x1xf32>
    %cst_1 = arith.constant 3.200000e+01 : f32
    %5 = vector.broadcast %cst_1 : f32 to vector<16x1xf32>
    %6 = arith.divf %4, %5 : vector<16x1xf32>
    %cst_2 = arith.constant 9.99999997E-7 : f32
    %7 = vector.broadcast %cst_2 : f32 to vector<16x1xf32>
    %8 = arith.addf %6, %7 : vector<16x1xf32>
    %9 = math.rsqrt %8 : vector<16x1xf32>
    %10 = vector.broadcast %9 : vector<16x1xf32> to vector<16x32xf32>
    %11 = arith.mulf %1, %10 : vector<16x32xf32>
    %c0_3 = arith.constant 0 : index
    %c0_4 = arith.constant 0 : index
    %12 = vector.load %arg2[%c0_3, %c0_4] : memref<1x32xbf16, #tpu.memory_space<vmem>>, vector<1x32xbf16>
    %13 = arith.extf %12 : vector<1x32xbf16> to vector<1x32xf32>
    %cst_5 = arith.constant 1.000000e+00 : f32
    %14 = vector.broadcast %cst_5 : f32 to vector<1x32xf32>
    %15 = arith.addf %14, %13 : vector<1x32xf32>
    %16 = vector.broadcast %15 : vector<1x32xf32> to vector<16x32xf32>
    %17 = arith.mulf %11, %16 : vector<16x32xf32>
    %18 = arith.truncf %17 : vector<16x32xf32> to vector<16x32xbf16>
    %c0_6 = arith.constant 0 : index
    %c0_7 = arith.constant 0 : index
    %19 = vector.load %arg3[%c0_6, %c0_7] : memref<32x64xbf16, #tpu.memory_space<vmem>>, vector<32x64xbf16>
    %cst_8 = arith.constant dense<0.000000e+00> : vector<16x64xf32>
    %20 = tpu.matmul %18, %19, %cst_8 {dimension_numbers = #tpu.dot_dimension_numbers<[1], [0], [0], [1], [0, 0, 1, 1], [], []>} : vector<16x32xbf16>, vector<32x64xbf16>, vector<16x64xf32> -> vector<16x64xf32>
    %cst_9 = arith.constant 5.000000e-01 : f32
    %21 = vector.broadcast %cst_9 : f32 to vector<16x64xf32>
    %22 = arith.mulf %21, %20 : vector<16x64xf32>
    %cst_10 = arith.constant 4.471500e-02 : f32
    %23 = vector.broadcast %cst_10 : f32 to vector<16x64xf32>
    %24 = arith.mulf %23, %20 : vector<16x64xf32>
    %25 = arith.mulf %24, %20 : vector<16x64xf32>
    %26 = arith.mulf %25, %20 : vector<16x64xf32>
    %27 = arith.addf %20, %26 : vector<16x64xf32>
    %cst_11 = arith.constant 0.797884583 : f32
    %28 = vector.broadcast %cst_11 : f32 to vector<16x64xf32>
    %29 = arith.mulf %28, %27 : vector<16x64xf32>
    %30 = math.tanh %29 : vector<16x64xf32>
    %cst_12 = arith.constant 1.000000e+00 : f32
    %31 = vector.broadcast %cst_12 : f32 to vector<16x64xf32>
    %32 = arith.addf %31, %30 : vector<16x64xf32>
    %33 = arith.mulf %22, %32 : vector<16x64xf32>
    %c0_13 = arith.constant 0 : index
    %c0_14 = arith.constant 0 : index
    %34 = vector.load %arg4[%c0_13, %c0_14] : memref<32x64xbf16, #tpu.memory_space<vmem>>, vector<32x64xbf16>
    %cst_15 = arith.constant dense<0.000000e+00> : vector<16x64xf32>
    %35 = tpu.matmul %18, %34, %cst_15 {dimension_numbers = #tpu.dot_dimension_numbers<[1], [0], [0], [1], [0, 0, 1, 1], [], []>} : vector<16x32xbf16>, vector<32x64xbf16>, vector<16x64xf32> -> vector<16x64xf32>
    %36 = arith.mulf %33, %35 : vector<16x64xf32>
    %37 = arith.truncf %36 : vector<16x64xf32> to vector<16x64xbf16>
    %c0_16 = arith.constant 0 : index
    %c0_17 = arith.constant 0 : index
    %38 = vector.load %arg5[%c0_16, %c0_17] : memref<64x32xbf16, #tpu.memory_space<vmem>>, vector<64x32xbf16>
    %cst_18 = arith.constant dense<0.000000e+00> : vector<16x32xf32>
    %39 = tpu.matmul %37, %38, %cst_18 {dimension_numbers = #tpu.dot_dimension_numbers<[1], [0], [0], [1], [0, 0, 1, 1], [], []>} : vector<16x64xbf16>, vector<64x32xbf16>, vector<16x32xf32> -> vector<16x32xf32>
    %40 = arith.addf %1, %39 : vector<16x32xf32>
    %41 = arith.truncf %40 : vector<16x32xf32> to vector<16x32xbf16>
    %c0_19 = arith.constant 0 : index
    %c0_20 = arith.constant 0 : index
    %42 = vector.load %arg6[%c0_19, %c0_20] : memref<16x32xbf16, #tpu.memory_space<vmem>>, vector<16x32xbf16>
    tpu.vector_store %arg6[%c0_19, %c0_20], %41 {strides = array<i32>} : memref<16x32xbf16, #tpu.memory_space<vmem>>, vector<16x32xbf16>,
    return
  }
  func.func @transform_0(%arg0: i32) -> (i32, i32) {
    %c0_i32 = arith.constant 0 : i32
    %c0_i32_0 = arith.constant 0 : i32
    return %arg0, %c0_i32 : i32, i32
  }
  func.func @transform_1(%arg0: i32) -> (i32, i32) {
    %c0_i32 = arith.constant 0 : i32
    %c0_i32_0 = arith.constant 0 : i32
    %c0_i32_1 = arith.constant 0 : i32
    return %c0_i32, %c0_i32_0 : i32, i32
  }
  func.func @transform_2(%arg0: i32) -> (i32, i32) {
    %c0_i32 = arith.constant 0 : i32
    %c0_i32_0 = arith.constant 0 : i32
    %c0_i32_1 = arith.constant 0 : i32
    return %c0_i32, %c0_i32_0 : i32, i32
  }
  func.func @transform_3(%arg0: i32) -> (i32, i32) {
    %c0_i32 = arith.constant 0 : i32
    %c0_i32_0 = arith.constant 0 : i32
    %c0_i32_1 = arith.constant 0 : i32
    return %c0_i32, %c0_i32_0 : i32, i32
  }
  func.func @transform_4(%arg0: i32) -> (i32, i32) {
    %c0_i32 = arith.constant 0 : i32
    %c0_i32_0 = arith.constant 0 : i32
    %c0_i32_1 = arith.constant 0 : i32
    return %c0_i32, %c0_i32_0 : i32, i32
  }
  func.func @transform_5(%arg0: i32) -> (i32, i32) {
    %c0_i32 = arith.constant 0 : i32
    %c0_i32_0 = arith.constant 0 : i32
    return %arg0, %c0_i32 : i32, i32
  }
}

module attributes {stable_mosaic.version = 11 : i64} {
  func.func @_attn_block_kernel(%arg0: i32, %arg1: memref<8x1xi32, #tpu.memory_space<vmem>>, %arg2: memref<1x8x64xbf16, #tpu.memory_space<vmem>>, %arg3: memref<1x16x32xbf16, #tpu.memory_space<vmem>>, %arg4: memref<1x16x32xbf16, #tpu.memory_space<vmem>>, %arg5: memref<64x32xbf16, #tpu.memory_space<vmem>>, %arg6: memref<1x8x32xbf16, #tpu.memory_space<vmem>>, %arg7: memref<1x8x32xbf16, #tpu.memory_space<vmem>>) attributes {dimension_semantics = [#tpu.dimension_semantics<parallel>], iteration_bounds = array<i64: 2>, scalar_prefetch = 0 : i64, scratch_operands = 0 : i64, tpu.core_type = #tpu.core_type<tc>, window_params = [{pipeline_mode = #tpu.pipeline_mode<synchronous>, transform_indices = @transform_0, window_bounds = array<i64: 8, 1>}, {transform_indices = @transform_1, window_bounds = array<i64: 1, 8, 64>}, {transform_indices = @transform_2, window_bounds = array<i64: 1, 16, 32>}, {transform_indices = @transform_3, window_bounds = array<i64: 1, 16, 32>}, {pipeline_mode = #tpu.pipeline_mode<synchronous>, transform_indices = @transform_4, window_bounds = array<i64: 64, 32>}, {transform_indices = @transform_5, window_bounds = array<i64: 1, 8, 32>}, {transform_indices = @transform_6, window_bounds = array<i64: 1, 8, 32>}]} {
    %0 = tpu.iota {dimensions = array<i32: 1>} : vector<8x16xi32>
    %c0 = arith.constant 0 : index
    %c0_0 = arith.constant 0 : index
    %1 = vector.load %arg1[%c0, %c0_0] : memref<8x1xi32, #tpu.memory_space<vmem>>, vector<8x1xi32>
    %2 = vector.broadcast %1 : vector<8x1xi32> to vector<8x16xi32>
    %3 = arith.cmpi sle, %0, %2 : vector<8x16xi32>
    %cst = arith.constant 0.000000e+00 : f32
    %cst_1 = arith.constant -2.38197633E+38 : f32
    %4 = vector.broadcast %cst : f32 to vector<8x16xf32>
    %5 = vector.broadcast %cst_1 : f32 to vector<8x16xf32>
    %6 = arith.select %3, %4, %5 : vector<8x16xi1>, vector<8x16xf32>
    %c0_2 = arith.constant 0 : index
    %c0_3 = arith.constant 0 : index
    %c0_4 = arith.constant 0 : index
    %7 = vector.load %arg2[%c0_2, %c0_3, %c0_4] : memref<1x8x64xbf16, #tpu.memory_space<vmem>>, vector<1x8x64xbf16>
    %8 = vector.shape_cast %7 : vector<1x8x64xbf16> to vector<8x64xbf16>
    %c0_5 = arith.constant 0 : index
    %c0_6 = arith.constant 0 : index
    %c0_7 = arith.constant 0 : index
    %9 = vector.load %arg3[%c0_5, %c0_6, %c0_7] : memref<1x16x32xbf16, #tpu.memory_space<vmem>>, vector<1x16x32xbf16>
    %10 = vector.shape_cast %9 : vector<1x16x32xbf16> to vector<16x32xbf16>
    %c0_8 = arith.constant 0 : index
    %c0_9 = arith.constant 0 : index
    %c0_10 = arith.constant 0 : index
    %11 = vector.load %arg4[%c0_8, %c0_9, %c0_10] : memref<1x16x32xbf16, #tpu.memory_space<vmem>>, vector<1x16x32xbf16>
    %12 = vector.shape_cast %11 : vector<1x16x32xbf16> to vector<16x32xbf16>
    %13 = vector.extract_strided_slice %8 {offsets = [0, 0], sizes = [8, 16], strides = [1, 1]} : vector<8x64xbf16> to vector<8x16xbf16>
    %14 = vector.extract_strided_slice %10 {offsets = [0, 0], sizes = [16, 16], strides = [1, 1]} : vector<16x32xbf16> to vector<16x16xbf16>
    %15 = vector.extract_strided_slice %12 {offsets = [0, 0], sizes = [16, 16], strides = [1, 1]} : vector<16x32xbf16> to vector<16x16xbf16>
    %cst_11 = arith.constant dense<0.000000e+00> : vector<8x16xf32>
    %16 = tpu.matmul %13, %14, %cst_11 {dimension_numbers = #tpu.dot_dimension_numbers<[1], [1], [0], [0], [0, 0, 1, 0], [], []>} : vector<8x16xbf16>, vector<16x16xbf16>, vector<8x16xf32> -> vector<8x16xf32>
    %cst_12 = arith.constant 2.500000e-01 : f32
    %17 = vector.broadcast %cst_12 : f32 to vector<8x16xf32>
    %18 = arith.mulf %16, %17 : vector<8x16xf32>
    %19 = arith.addf %18, %6 : vector<8x16xf32>
    %cst_13 = arith.constant dense<0xFF800000> : vector<8xf32>
    %20 = vector.multi_reduction <maximumf>, %19, %cst_13 [1] : vector<8x16xf32> to vector<8xf32>
    %21 = vector.shape_cast %20 : vector<8xf32> to vector<8x1xf32>
    %22 = vector.broadcast %21 : vector<8x1xf32> to vector<8x16xf32>
    %23 = arith.subf %19, %22 : vector<8x16xf32>
    %24 = math.exp %23 : vector<8x16xf32>
    %cst_14 = arith.constant dense<0.000000e+00> : vector<8xf32>
    %25 = vector.multi_reduction <add>, %24, %cst_14 [1] : vector<8x16xf32> to vector<8xf32>
    %26 = vector.shape_cast %25 : vector<8xf32> to vector<8x1xf32>
    %27 = vector.broadcast %26 : vector<8x1xf32> to vector<8x16xf32>
    %28 = arith.divf %24, %27 : vector<8x16xf32>
    %29 = arith.truncf %28 : vector<8x16xf32> to vector<8x16xbf16>
    %cst_15 = arith.constant dense<0.000000e+00> : vector<8x16xf32>
    %30 = tpu.matmul %29, %15, %cst_15 {dimension_numbers = #tpu.dot_dimension_numbers<[1], [0], [0], [1], [0, 0, 1, 1], [], []>} : vector<8x16xbf16>, vector<16x16xbf16>, vector<8x16xf32> -> vector<8x16xf32>
    %31 = vector.extract_strided_slice %8 {offsets = [0, 16], sizes = [8, 16], strides = [1, 1]} : vector<8x64xbf16> to vector<8x16xbf16>
    %32 = vector.extract_strided_slice %10 {offsets = [0, 0], sizes = [16, 16], strides = [1, 1]} : vector<16x32xbf16> to vector<16x16xbf16>
    %33 = vector.extract_strided_slice %12 {offsets = [0, 0], sizes = [16, 16], strides = [1, 1]} : vector<16x32xbf16> to vector<16x16xbf16>
    %cst_16 = arith.constant dense<0.000000e+00> : vector<8x16xf32>
    %34 = tpu.matmul %31, %32, %cst_16 {dimension_numbers = #tpu.dot_dimension_numbers<[1], [1], [0], [0], [0, 0, 1, 0], [], []>} : vector<8x16xbf16>, vector<16x16xbf16>, vector<8x16xf32> -> vector<8x16xf32>
    %cst_17 = arith.constant 2.500000e-01 : f32
    %35 = vector.broadcast %cst_17 : f32 to vector<8x16xf32>
    %36 = arith.mulf %34, %35 : vector<8x16xf32>
    %37 = arith.addf %36, %6 : vector<8x16xf32>
    %cst_18 = arith.constant dense<0xFF800000> : vector<8xf32>
    %38 = vector.multi_reduction <maximumf>, %37, %cst_18 [1] : vector<8x16xf32> to vector<8xf32>
    %39 = vector.shape_cast %38 : vector<8xf32> to vector<8x1xf32>
    %40 = vector.broadcast %39 : vector<8x1xf32> to vector<8x16xf32>
    %41 = arith.subf %37, %40 : vector<8x16xf32>
    %42 = math.exp %41 : vector<8x16xf32>
    %cst_19 = arith.constant dense<0.000000e+00> : vector<8xf32>
    %43 = vector.multi_reduction <add>, %42, %cst_19 [1] : vector<8x16xf32> to vector<8xf32>
    %44 = vector.shape_cast %43 : vector<8xf32> to vector<8x1xf32>
    %45 = vector.broadcast %44 : vector<8x1xf32> to vector<8x16xf32>
    %46 = arith.divf %42, %45 : vector<8x16xf32>
    %47 = arith.truncf %46 : vector<8x16xf32> to vector<8x16xbf16>
    %cst_20 = arith.constant dense<0.000000e+00> : vector<8x16xf32>
    %48 = tpu.matmul %47, %33, %cst_20 {dimension_numbers = #tpu.dot_dimension_numbers<[1], [0], [0], [1], [0, 0, 1, 1], [], []>} : vector<8x16xbf16>, vector<16x16xbf16>, vector<8x16xf32> -> vector<8x16xf32>
    %49 = vector.extract_strided_slice %8 {offsets = [0, 32], sizes = [8, 16], strides = [1, 1]} : vector<8x64xbf16> to vector<8x16xbf16>
    %50 = vector.extract_strided_slice %10 {offsets = [0, 16], sizes = [16, 16], strides = [1, 1]} : vector<16x32xbf16> to vector<16x16xbf16>
    %51 = vector.extract_strided_slice %12 {offsets = [0, 16], sizes = [16, 16], strides = [1, 1]} : vector<16x32xbf16> to vector<16x16xbf16>
    %cst_21 = arith.constant dense<0.000000e+00> : vector<8x16xf32>
    %52 = tpu.matmul %49, %50, %cst_21 {dimension_numbers = #tpu.dot_dimension_numbers<[1], [1], [0], [0], [0, 0, 1, 0], [], []>} : vector<8x16xbf16>, vector<16x16xbf16>, vector<8x16xf32> -> vector<8x16xf32>
    %cst_22 = arith.constant 2.500000e-01 : f32
    %53 = vector.broadcast %cst_22 : f32 to vector<8x16xf32>
    %54 = arith.mulf %52, %53 : vector<8x16xf32>
    %55 = arith.addf %54, %6 : vector<8x16xf32>
    %cst_23 = arith.constant dense<0xFF800000> : vector<8xf32>
    %56 = vector.multi_reduction <maximumf>, %55, %cst_23 [1] : vector<8x16xf32> to vector<8xf32>
    %57 = vector.shape_cast %56 : vector<8xf32> to vector<8x1xf32>
    %58 = vector.broadcast %57 : vector<8x1xf32> to vector<8x16xf32>
    %59 = arith.subf %55, %58 : vector<8x16xf32>
    %60 = math.exp %59 : vector<8x16xf32>
    %cst_24 = arith.constant dense<0.000000e+00> : vector<8xf32>
    %61 = vector.multi_reduction <add>, %60, %cst_24 [1] : vector<8x16xf32> to vector<8xf32>
    %62 = vector.shape_cast %61 : vector<8xf32> to vector<8x1xf32>
    %63 = vector.broadcast %62 : vector<8x1xf32> to vector<8x16xf32>
    %64 = arith.divf %60, %63 : vector<8x16xf32>
    %65 = arith.truncf %64 : vector<8x16xf32> to vector<8x16xbf16>
    %cst_25 = arith.constant dense<0.000000e+00> : vector<8x16xf32>
    %66 = tpu.matmul %65, %51, %cst_25 {dimension_numbers = #tpu.dot_dimension_numbers<[1], [0], [0], [1], [0, 0, 1, 1], [], []>} : vector<8x16xbf16>, vector<16x16xbf16>, vector<8x16xf32> -> vector<8x16xf32>
    %67 = vector.extract_strided_slice %8 {offsets = [0, 48], sizes = [8, 16], strides = [1, 1]} : vector<8x64xbf16> to vector<8x16xbf16>
    %68 = vector.extract_strided_slice %10 {offsets = [0, 16], sizes = [16, 16], strides = [1, 1]} : vector<16x32xbf16> to vector<16x16xbf16>
    %69 = vector.extract_strided_slice %12 {offsets = [0, 16], sizes = [16, 16], strides = [1, 1]} : vector<16x32xbf16> to vector<16x16xbf16>
    %cst_26 = arith.constant dense<0.000000e+00> : vector<8x16xf32>
    %70 = tpu.matmul %67, %68, %cst_26 {dimension_numbers = #tpu.dot_dimension_numbers<[1], [1], [0], [0], [0, 0, 1, 0], [], []>} : vector<8x16xbf16>, vector<16x16xbf16>, vector<8x16xf32> -> vector<8x16xf32>
    %cst_27 = arith.constant 2.500000e-01 : f32
    %71 = vector.broadcast %cst_27 : f32 to vector<8x16xf32>
    %72 = arith.mulf %70, %71 : vector<8x16xf32>
    %73 = arith.addf %72, %6 : vector<8x16xf32>
    %cst_28 = arith.constant dense<0xFF800000> : vector<8xf32>
    %74 = vector.multi_reduction <maximumf>, %73, %cst_28 [1] : vector<8x16xf32> to vector<8xf32>
    %75 = vector.shape_cast %74 : vector<8xf32> to vector<8x1xf32>
    %76 = vector.broadcast %75 : vector<8x1xf32> to vector<8x16xf32>
    %77 = arith.subf %73, %76 : vector<8x16xf32>
    %78 = math.exp %77 : vector<8x16xf32>
    %cst_29 = arith.constant dense<0.000000e+00> : vector<8xf32>
    %79 = vector.multi_reduction <add>, %78, %cst_29 [1] : vector<8x16xf32> to vector<8xf32>
    %80 = vector.shape_cast %79 : vector<8xf32> to vector<8x1xf32>
    %81 = vector.broadcast %80 : vector<8x1xf32> to vector<8x16xf32>
    %82 = arith.divf %78, %81 : vector<8x16xf32>
    %83 = arith.truncf %82 : vector<8x16xf32> to vector<8x16xbf16>
    %cst_30 = arith.constant dense<0.000000e+00> : vector<8x16xf32>
    %84 = tpu.matmul %83, %69, %cst_30 {dimension_numbers = #tpu.dot_dimension_numbers<[1], [0], [0], [1], [0, 0, 1, 1], [], []>} : vector<8x16xbf16>, vector<16x16xbf16>, vector<8x16xf32> -> vector<8x16xf32>
    %85 = tpu.concatenate %30, %48, %66, %84 in 1 : vector<8x16xf32>, vector<8x16xf32>, vector<8x16xf32>, vector<8x16xf32> -> vector<8x64xf32>
    %86 = arith.truncf %85 : vector<8x64xf32> to vector<8x64xbf16>
    %c0_31 = arith.constant 0 : index
    %c0_32 = arith.constant 0 : index
    %87 = vector.load %arg5[%c0_31, %c0_32] : memref<64x32xbf16, #tpu.memory_space<vmem>>, vector<64x32xbf16>
    %cst_33 = arith.constant dense<0.000000e+00> : vector<8x32xf32>
    %88 = tpu.matmul %86, %87, %cst_33 {dimension_numbers = #tpu.dot_dimension_numbers<[1], [0], [0], [1], [0, 0, 1, 1], [], []>} : vector<8x64xbf16>, vector<64x32xbf16>, vector<8x32xf32> -> vector<8x32xf32>
    %c0_34 = arith.constant 0 : index
    %c0_35 = arith.constant 0 : index
    %c0_36 = arith.constant 0 : index
    %89 = vector.load %arg6[%c0_34, %c0_35, %c0_36] : memref<1x8x32xbf16, #tpu.memory_space<vmem>>, vector<1x8x32xbf16>
    %90 = vector.shape_cast %89 : vector<1x8x32xbf16> to vector<8x32xbf16>
    %91 = arith.extf %90 : vector<8x32xbf16> to vector<8x32xf32>
    %92 = arith.addf %88, %91 : vector<8x32xf32>
    %93 = arith.truncf %92 : vector<8x32xf32> to vector<8x32xbf16>
    %c0_37 = arith.constant 0 : index
    %c0_38 = arith.constant 0 : index
    %c0_39 = arith.constant 0 : index
    %94 = vector.load %arg7[%c0_37, %c0_38, %c0_39] : memref<1x8x32xbf16, #tpu.memory_space<vmem>>, vector<1x8x32xbf16>
    %95 = vector.shape_cast %94 : vector<1x8x32xbf16> to vector<8x32xbf16>
    %96 = vector.shape_cast %93 : vector<8x32xbf16> to vector<1x8x32xbf16>
    tpu.vector_store %arg7[%c0_37, %c0_38, %c0_39], %96 {strides = array<i32>} : memref<1x8x32xbf16, #tpu.memory_space<vmem>>, vector<1x8x32xbf16>,
    return
  }
  func.func @transform_0(%arg0: i32) -> (i32, i32) {
    %c0_i32 = arith.constant 0 : i32
    %c0_i32_0 = arith.constant 0 : i32
    %c0_i32_1 = arith.constant 0 : i32
    return %c0_i32, %c0_i32_0 : i32, i32
  }
  func.func @transform_1(%arg0: i32) -> (i32, i32, i32) {
    %c0_i32 = arith.constant 0 : i32
    %c0_i32_0 = arith.constant 0 : i32
    %c0_i32_1 = arith.constant 0 : i32
    return %arg0, %c0_i32, %c0_i32_0 : i32, i32, i32
  }
  func.func @transform_2(%arg0: i32) -> (i32, i32, i32) {
    %c0_i32 = arith.constant 0 : i32
    %c0_i32_0 = arith.constant 0 : i32
    %c0_i32_1 = arith.constant 0 : i32
    return %arg0, %c0_i32, %c0_i32_0 : i32, i32, i32
  }
  func.func @transform_3(%arg0: i32) -> (i32, i32, i32) {
    %c0_i32 = arith.constant 0 : i32
    %c0_i32_0 = arith.constant 0 : i32
    %c0_i32_1 = arith.constant 0 : i32
    return %arg0, %c0_i32, %c0_i32_0 : i32, i32, i32
  }
  func.func @transform_4(%arg0: i32) -> (i32, i32) {
    %c0_i32 = arith.constant 0 : i32
    %c0_i32_0 = arith.constant 0 : i32
    %c0_i32_1 = arith.constant 0 : i32
    return %c0_i32, %c0_i32_0 : i32, i32
  }
  func.func @transform_5(%arg0: i32) -> (i32, i32, i32) {
    %c0_i32 = arith.constant 0 : i32
    %c0_i32_0 = arith.constant 0 : i32
    %c0_i32_1 = arith.constant 0 : i32
    return %arg0, %c0_i32, %c0_i32_0 : i32, i32, i32
  }
  func.func @transform_6(%arg0: i32) -> (i32, i32, i32) {
    %c0_i32 = arith.constant 0 : i32
    %c0_i32_0 = arith.constant 0 : i32
    %c0_i32_1 = arith.constant 0 : i32
    return %arg0, %c0_i32, %c0_i32_0 : i32, i32, i32
  }
}

module attributes {stable_mosaic.version = 11 : i64} {
  func.func @_rmsnorm_matmul_kernel(%arg0: i32, %arg1: i32, %arg2: memref<2x32xbf16, #tpu.memory_space<vmem>>, %arg3: memref<1x32xbf16, #tpu.memory_space<vmem>>, %arg4: memref<32x128xbf16, #tpu.memory_space<vmem>>, %arg5: memref<2x128xf32, #tpu.memory_space<vmem>>) attributes {dimension_semantics = [#tpu.dimension_semantics<parallel>, #tpu.dimension_semantics<parallel>], iteration_bounds = array<i64: 1, 2>, scalar_prefetch = 0 : i64, scratch_operands = 0 : i64, tpu.core_type = #tpu.core_type<tc>, window_params = [{transform_indices = @transform_0, window_bounds = array<i64: 2, 32>}, {pipeline_mode = #tpu.pipeline_mode<synchronous>, transform_indices = @transform_1, window_bounds = array<i64: 1, 32>}, {transform_indices = @transform_2, window_bounds = array<i64: 32, 128>}, {transform_indices = @transform_3, window_bounds = array<i64: 2, 128>}]} {
    %c0 = arith.constant 0 : index
    %c0_0 = arith.constant 0 : index
    %0 = vector.load %arg2[%c0, %c0_0] : memref<2x32xbf16, #tpu.memory_space<vmem>>, vector<2x32xbf16>
    %1 = arith.extf %0 : vector<2x32xbf16> to vector<2x32xf32>
    %2 = arith.mulf %1, %1 : vector<2x32xf32>
    %cst = arith.constant dense<0.000000e+00> : vector<2xf32>
    %3 = vector.multi_reduction <add>, %2, %cst [1] : vector<2x32xf32> to vector<2xf32>
    %4 = vector.shape_cast %3 : vector<2xf32> to vector<2x1xf32>
    %cst_1 = arith.constant 3.200000e+01 : f32
    %5 = vector.broadcast %cst_1 : f32 to vector<2x1xf32>
    %6 = arith.divf %4, %5 : vector<2x1xf32>
    %cst_2 = arith.constant 9.99999997E-7 : f32
    %7 = vector.broadcast %cst_2 : f32 to vector<2x1xf32>
    %8 = arith.addf %6, %7 : vector<2x1xf32>
    %9 = math.rsqrt %8 : vector<2x1xf32>
    %10 = vector.broadcast %9 : vector<2x1xf32> to vector<2x32xf32>
    %11 = arith.mulf %1, %10 : vector<2x32xf32>
    %c0_3 = arith.constant 0 : index
    %c0_4 = arith.constant 0 : index
    %12 = vector.load %arg3[%c0_3, %c0_4] : memref<1x32xbf16, #tpu.memory_space<vmem>>, vector<1x32xbf16>
    %13 = arith.extf %12 : vector<1x32xbf16> to vector<1x32xf32>
    %cst_5 = arith.constant 1.000000e+00 : f32
    %14 = vector.broadcast %cst_5 : f32 to vector<1x32xf32>
    %15 = arith.addf %14, %13 : vector<1x32xf32>
    %16 = vector.broadcast %15 : vector<1x32xf32> to vector<2x32xf32>
    %17 = arith.mulf %11, %16 : vector<2x32xf32>
    %18 = arith.truncf %17 : vector<2x32xf32> to vector<2x32xbf16>
    %c0_6 = arith.constant 0 : index
    %c0_7 = arith.constant 0 : index
    %19 = vector.load %arg4[%c0_6, %c0_7] : memref<32x128xbf16, #tpu.memory_space<vmem>>, vector<32x128xbf16>
    %cst_8 = arith.constant dense<0.000000e+00> : vector<2x128xf32>
    %20 = tpu.matmul %18, %19, %cst_8 {dimension_numbers = #tpu.dot_dimension_numbers<[1], [0], [0], [1], [0, 0, 1, 1], [], []>} : vector<2x32xbf16>, vector<32x128xbf16>, vector<2x128xf32> -> vector<2x128xf32>
    %c0_9 = arith.constant 0 : index
    %c0_10 = arith.constant 0 : index
    %21 = vector.load %arg5[%c0_9, %c0_10] : memref<2x128xf32, #tpu.memory_space<vmem>>, vector<2x128xf32>
    tpu.vector_store %arg5[%c0_9, %c0_10], %20 {strides = array<i32>} : memref<2x128xf32, #tpu.memory_space<vmem>>, vector<2x128xf32>,
    return
  }
  func.func @transform_0(%arg0: i32, %arg1: i32) -> (i32, i32) {
    %c0_i32 = arith.constant 0 : i32
    %c0_i32_0 = arith.constant 0 : i32
    return %arg0, %c0_i32 : i32, i32
  }
  func.func @transform_1(%arg0: i32, %arg1: i32) -> (i32, i32) {
    %c0_i32 = arith.constant 0 : i32
    %c0_i32_0 = arith.constant 0 : i32
    %c0_i32_1 = arith.constant 0 : i32
    return %c0_i32, %c0_i32_0 : i32, i32
  }
  func.func @transform_2(%arg0: i32, %arg1: i32) -> (i32, i32) {
    %c0_i32 = arith.constant 0 : i32
    %c0_i32_0 = arith.constant 0 : i32
    return %c0_i32, %arg1 : i32, i32
  }
  func.func @transform_3(%arg0: i32, %arg1: i32) -> (i32, i32) {
    %c0_i32 = arith.constant 0 : i32
    return %arg0, %arg1 : i32, i32
  }
}

</mosaic_0001>

<llo_original>
// kernel: gemma_forward.7
$region0: #{gemma_forward.7}
  #allocation0 [shape = 'u32[]', space=smem, size = 0x4, offset = 0x4, fixed_abs, tag = 'smem constant byte address 0x4 - core index']
  #allocation1 [shape = 'u32[144,128]{1,0:T(1,128)}', space=vmem, size = 0x12000, scoped, tag = 'internal scratch']
  %s0 = inlined_call_operand.vmem [shape: bf16[16,32], index: 0, kind: input, shape index: {}]
  %s1 = inlined_call_operand.vmem [shape: bf16[1,32], index: 1, kind: input, shape index: {}]
  %s2 = inlined_call_operand.vmem [shape: bf16[32,128], index: 2, kind: input, shape index: {}]
  %s3 = inlined_call_operand.vmem [shape: bf16[16,128], index: 3, kind: output, shape index: {}]
  %s4 = sld [smem:[#allocation0]]
  $region22: #{gemma_forward.7} parent=0
    _
  %s6 = ssub.s32 1, %s4
  %s7 = scalar_select 0, %s6, %s4
  // Predicated region
  $region2: #{gemma_forward.7} parent=0 // pred_check
    _
  $region3: #{gemma_forward.7} parent=0 // pred_check_branch
    %9 = sbr.rel (0) target = $region5
  $region4: #{gemma_forward.7} parent=0 // pred_region
    _
  $region5: #{gemma_forward.7} parent=0 // pred_fallthru
    _
  // Predicated region
  $region6: #{gemma_forward.7} parent=0 // pred_check
    _
  $region7: #{gemma_forward.7} parent=0 // pred_check_branch
    %11 = sbr.rel (0) target = $region9
  $region8: #{gemma_forward.7} parent=0 // pred_region
    _
  $region9: #{gemma_forward.7} parent=0 // pred_fallthru
    _
  // Predicated region
  $region10: #{gemma_forward.7} parent=0 // pred_check
    _
  $region11: #{gemma_forward.7} parent=0 // pred_check_branch
    %13 = sbr.rel (0) target = $region13
  $region12: #{gemma_forward.7} parent=0 // pred_region
    _
  $region13: #{gemma_forward.7} parent=0 // pred_fallthru
    _
  %v15 = vld [vmem:[%s0] sm:$0xf]
  %v16 = vld [vmem:[%s0 + $0x4] sm:$0xf]
  %v17 = vunpack.c.l.bf16 %v15
  %v18 = vunpack.c.l.bf16 %v16
  %v19 = vmul.f32 %v17, %v17
  %v20 = vmul.f32 %v18, %v18
  %vm21 = vcmask 261120
  %v22 = vsel %vm21, %v19, 0.0
  %23 = vadd.xlane.f32.xlu0 %v22
  %v24 = vpop.xlane.xlu0 %23
  %v25 = vsel %vm21, %v20, 0.0
  %26 = vadd.xlane.f32.xlu0 %v25
  %v27 = vpop.xlane.xlu0 %26
  %v28 = vrcp.pop 32.0
  %v29 = vmul.f32 %v24, %v28
  %v30 = vmul.f32 %v27, %v28
  %v31 = vadd.f32 %v29, 1e-06
  %v32 = vadd.f32 %v30, 1e-06
  %v33 = vrsqrt.pop %v31
  %v34 = vrsqrt.pop %v32
  %v35 = vmul.f32 %v17, %v33
  %v36 = vmul.f32 %v18, %v34
  %v37 = vld [vmem:[%s1] sm:$0x1]
  %v38 = vunpack.c.l.bf16 %v37
  %v39 = vadd.f32 %v38, 1.0
  %v40 = vlaneseq
  %v41 = vshrl.u32 %v40, 7
  %v42 = vsub.s32 0, %v41
  %v43 = vrot.slane %v39, %v42
  %v44 = vmul.f32 %v35, %v43
  %v45 = vmul.f32 %v36, %v43
  %v46 = vpack.c.bf16 %v45, %v44
  %v47 = vld [vmem:[%s2] sm:$0xf]
  %v48 = vld [vmem:[%s2 + $0x4] sm:$0xf]
  %v49 = vld [vmem:[%s2 + $0x8] sm:$0xf]
  %v50 = vld [vmem:[%s2 + $0xc] sm:$0xf]
  %v55 = vunpack.c.l.b16 %v47
  %v56 = vunpack.c.l.b16 %v48
  %v57 = vunpack.c.l.b16 %v49
  %v58 = vunpack.c.l.b16 %v50
  %v59 = vpack.c.b16 %v56, %v55
  %v60 = vpack.c.b16 %v58, %v57
  %v64 = vsel %vm21, %v46, 0
  %66 = vmatprep.subr.bf16.mxu0 0
  %67 = vmatpush1.bf16.msra.mxu0 0
  %68 = vmatprep.subr.bf16.mxu0 0
  %69 = vmatpush1.bf16.msra.mxu0 0
  %70 = vmatprep.subr.bf16.mxu0 0
  %71 = vmatpush1.bf16.msra.mxu0 0
  %72 = vmatprep.subr.bf16.mxu0 0
  %73 = vmatpush1.bf16.msra.mxu0 0
  %74 = vmatprep.subr.bf16.mxu0 0
  %75 = vmatpush1.bf16.msra.mxu0 0
  %76 = vmatprep.subr.bf16.mxu0 0
  %77 = vmatpush1.bf16.msra.mxu0 0
  %78 = vmatprep.subr.bf16.mxu0 0
  %79 = vmatpush1.bf16.msra.mxu0 %v60
  %80 = vmatprep.subr.bf16.mxu0 0
  %81 = vmatpush1.bf16.msra.mxu0 %v59
  %82 = vmatprep.subr.bf16.mxu0 0
  %83 = vmatpush2.bf16.msra.mxu0 0
  %84 = vmatprep.subr.bf16.mxu0 0
  %85 = vmatpush2.bf16.msra.mxu0 0
  %86 = vmatprep.subr.bf16.mxu0 0
  %87 = vmatpush2.bf16.msra.mxu0 0
  %88 = vmatprep.subr.bf16.mxu0 0
  %89 = vmatpush2.bf16.msra.mxu0 0
  %90 = vmatprep.subr.bf16.mxu0 0
  %91 = vmatpush2.bf16.msra.mxu0 0
  %92 = vmatprep.subr.bf16.mxu0 0
  %93 = vmatpush2.bf16.msra.mxu0 0
  %94 = vmatprep.subr.bf16.mxu0 0
  %95 = vmatpush2.bf16.msra.mxu0 0
  %96 = vmatprep.subr.bf16.mxu0 0
  %97 = vmatpush2.bf16.msra.mxu0 0
  %98 = vmatprep.mubr.bf16.mxu0 0
  %99 = vmatmul.mubr.bf16.gmra.mxu0 %v64
  %v100 = vpop.f32.mrf.mxu0
  %v101 = vadd.f32 0.0, %v100
  %v102 = vpop.f32.mrf.mxu0
  %v103 = vpop.f32.mrf.mxu0
  %v104 = vadd.f32 0.0, %v103
  %v105 = vpop.f32.mrf.mxu0
  %106 = vdwg.mxu0
  %v107 = vpack.c.bf16 %v104, %v101
  %v109 = vunpack.c.l.b16 %v107
  %v110 = vunpack.c.h.b16 %v107
  %v111 = vpack.c.b16 %v109, %v109
  %v112 = vpack.c.b16 %v110, %v110
  %115 = vst [vmem:[%s3] sm:$0xf] %v111
  %116 = vst [vmem:[%s3 + $0x4] sm:$0xf] %v112
  // Predicated region
  $region14: #{gemma_forward.7} parent=0 // pred_check
    _
  $region15: #{gemma_forward.7} parent=0 // pred_check_branch
    %118 = sbr.rel (0) target = $region17
  $region16: #{gemma_forward.7} parent=0 // pred_region
    _
  $region17: #{gemma_forward.7} parent=0 // pred_fallthru
    _
  // Predicated region
  $region18: #{gemma_forward.7} parent=0 // pred_check
    _
  $region19: #{gemma_forward.7} parent=0 // pred_check_branch
    %120 = sbr.rel (0) target = $region21
  $region20: #{gemma_forward.7} parent=0 // pred_region
    _
  $region21: #{gemma_forward.7} parent=0 // pred_fallthru
    _

// kernel: gemma_forward.9
$region0: #{gemma_forward.9}
  #allocation0 [shape = 'u32[]', space=smem, size = 0x4, offset = 0x4, fixed_abs, tag = 'smem constant byte address 0x4 - core index']
  #allocation1 [shape = 'u32[144,128]{1,0:T(1,128)}', space=vmem, size = 0x12000, scoped, tag = 'internal scratch']
  %s0 = inlined_call_operand.vmem [shape: bf16[16,32], index: 0, kind: input, shape index: {}]
  %s1 = inlined_call_operand.vmem [shape: bf16[1,32], index: 1, kind: input, shape index: {}]
  %s2 = inlined_call_operand.vmem [shape: bf16[32,64], index: 2, kind: input, shape index: {}]
  %s3 = inlined_call_operand.vmem [shape: bf16[32,64], index: 3, kind: input, shape index: {}]
  %s4 = inlined_call_operand.vmem [shape: bf16[64,32], index: 4, kind: input, shape index: {}]
  %s5 = inlined_call_operand.vmem [shape: bf16[16,32], index: 5, kind: output, shape index: {}]
  %s6 = sld [smem:[#allocation0]]
  $region30: #{gemma_forward.9} parent=0
    _
  %s8 = ssub.s32 1, %s6
  %s9 = scalar_select 0, %s8, %s6
  // Predicated region
  $region2: #{gemma_forward.9} parent=0 // pred_check
    _
  $region3: #{gemma_forward.9} parent=0 // pred_check_branch
    %11 = sbr.rel (0) target = $region5
  $region4: #{gemma_forward.9} parent=0 // pred_region
    _
  $region5: #{gemma_forward.9} parent=0 // pred_fallthru
    _
  // Predicated region
  $region6: #{gemma_forward.9} parent=0 // pred_check
    _
  $region7: #{gemma_forward.9} parent=0 // pred_check_branch
    %13 = sbr.rel (0) target = $region9
  $region8: #{gemma_forward.9} parent=0 // pred_region
    _
  $region9: #{gemma_forward.9} parent=0 // pred_fallthru
    _
  // Predicated region
  $region10: #{gemma_forward.9} parent=0 // pred_check
    _
  $region11: #{gemma_forward.9} parent=0 // pred_check_branch
    %15 = sbr.rel (0) target = $region13
  $region12: #{gemma_forward.9} parent=0 // pred_region
    _
  $region13: #{gemma_forward.9} parent=0 // pred_fallthru
    _
  // Predicated region
  $region14: #{gemma_forward.9} parent=0 // pred_check
    _
  $region15: #{gemma_forward.9} parent=0 // pred_check_branch
    %17 = sbr.rel (0) target = $region17
  $region16: #{gemma_forward.9} parent=0 // pred_region
    _
  $region17: #{gemma_forward.9} parent=0 // pred_fallthru
    _
  // Predicated region
  $region18: #{gemma_forward.9} parent=0 // pred_check
    _
  $region19: #{gemma_forward.9} parent=0 // pred_check_branch
    %19 = sbr.rel (0) target = $region21
  $region20: #{gemma_forward.9} parent=0 // pred_region
    _
  $region21: #{gemma_forward.9} parent=0 // pred_fallthru
    _
  %v21 = vld [vmem:[%s0] sm:$0xf]
  %v22 = vld [vmem:[%s0 + $0x4] sm:$0xf]
  %v23 = vunpack.c.l.bf16 %v21
  %v24 = vunpack.c.l.bf16 %v22
  %v25 = vmul.f32 %v23, %v23
  %v26 = vmul.f32 %v24, %v24
  %vm27 = vcmask 261120
  %v28 = vsel %vm27, %v25, 0.0
  %29 = vadd.xlane.f32.xlu0 %v28
  %v30 = vpop.xlane.xlu0 %29
  %v31 = vsel %vm27, %v26, 0.0
  %32 = vadd.xlane.f32.xlu0 %v31
  %v33 = vpop.xlane.xlu0 %32
  %v34 = vrcp.pop 32.0
  %v35 = vmul.f32 %v30, %v34
  %v36 = vmul.f32 %v33, %v34
  %v37 = vadd.f32 %v35, 1e-06
  %v38 = vadd.f32 %v36, 1e-06
  %v39 = vrsqrt.pop %v37
  %v40 = vrsqrt.pop %v38
  %v41 = vmul.f32 %v23, %v39
  %v42 = vmul.f32 %v24, %v40
  %v43 = vld [vmem:[%s1] sm:$0x1]
  %v44 = vunpack.c.l.bf16 %v43
  %v45 = vadd.f32 %v44, 1.0
  %v46 = vlaneseq
  %v47 = vshrl.u32 %v46, 7
  %v48 = vsub.s32 0, %v47
  %v49 = vrot.slane %v45, %v48
  %v50 = vmul.f32 %v41, %v49
  %v51 = vmul.f32 %v42, %v49
  %v52 = vpack.c.bf16 %v51, %v50
  %v53 = vld [vmem:[%s2] sm:$0xf]
  %v54 = vld [vmem:[%s2 + $0x4] sm:$0xf]
  %v55 = vld [vmem:[%s2 + $0x8] sm:$0xf]
  %v56 = vld [vmem:[%s2 + $0xc] sm:$0xf]
  %v61 = vunpack.c.l.b16 %v53
  %v62 = vunpack.c.l.b16 %v54
  %v63 = vunpack.c.l.b16 %v55
  %v64 = vunpack.c.l.b16 %v56
  %v65 = vpack.c.b16 %v62, %v61
  %v66 = vpack.c.b16 %v64, %v63
  %v70 = vsel %vm27, %v52, 0
  %72 = vmatprep.subr.bf16.mxu0 0
  %73 = vmatpush1.bf16.msra.mxu0 0
  %74 = vmatprep.subr.bf16.mxu0 0
  %75 = vmatpush1.bf16.msra.mxu0 0
  %76 = vmatprep.subr.bf16.mxu0 0
  %77 = vmatpush1.bf16.msra.mxu0 0
  %78 = vmatprep.subr.bf16.mxu0 0
  %79 = vmatpush1.bf16.msra.mxu0 0
  %80 = vmatprep.subr.bf16.mxu0 0
  %81 = vmatpush1.bf16.msra.mxu0 0
  %82 = vmatprep.subr.bf16.mxu0 0
  %83 = vmatpush1.bf16.msra.mxu0 0
  %84 = vmatprep.subr.bf16.mxu0 0
  %85 = vmatpush1.bf16.msra.mxu0 %v66
  %86 = vmatprep.subr.bf16.mxu0 0
  %87 = vmatpush1.bf16.msra.mxu0 %v65
  %88 = vmatprep.subr.bf16.mxu0 0
  %89 = vmatpush2.bf16.msra.mxu0 0
  %90 = vmatprep.subr.bf16.mxu0 0
  %91 = vmatpush2.bf16.msra.mxu0 0
  %92 = vmatprep.subr.bf16.mxu0 0
  %93 = vmatpush2.bf16.msra.mxu0 0
  %94 = vmatprep.subr.bf16.mxu0 0
  %95 = vmatpush2.bf16.msra.mxu0 0
  %96 = vmatprep.subr.bf16.mxu0 0
  %97 = vmatpush2.bf16.msra.mxu0 0
  %98 = vmatprep.subr.bf16.mxu0 0
  %99 = vmatpush2.bf16.msra.mxu0 0
  %100 = vmatprep.subr.bf16.mxu0 0
  %101 = vmatpush2.bf16.msra.mxu0 0
  %102 = vmatprep.subr.bf16.mxu0 0
  %103 = vmatpush2.bf16.msra.mxu0 0
  %104 = vmatprep.mubr.bf16.mxu0 0
  %105 = vmatmul.mubr.bf16.gmra.mxu0 %v70
  %v106 = vpop.f32.mrf.mxu0
  %v107 = vadd.f32 0.0, %v106
  %v108 = vpop.f32.mrf.mxu0
  %v109 = vpop.f32.mrf.mxu0
  %v110 = vadd.f32 0.0, %v109
  %v111 = vpop.f32.mrf.mxu0
  %112 = vdwg.mxu0
  %v113 = vmul.f32 %v107, 0.5
  %v114 = vmul.f32 %v110, 0.5
  %v115 = vmul.f32 %v107, 0.044715
  %v116 = vmul.f32 %v110, 0.044715
  %v117 = vmul.f32 %v115, %v107
  %v118 = vmul.f32 %v116, %v110
  %v119 = vmul.f32 %v117, %v107
  %v120 = vmul.f32 %v118, %v110
  %v121 = vadd.f32 %v107, %v119
  %v122 = vadd.f32 %v110, %v120
  %v123 = vmul.f32 %v121, 0.7978846
  %v124 = vmul.f32 %v122, 0.7978846
  %v125 = vtanh.pop %v123
  %v126 = vtanh.pop %v124
  %v127 = vadd.f32 %v125, 1.0
  %v128 = vadd.f32 %v126, 1.0
  %v129 = vmul.f32 %v113, %v127
  %v130 = vmul.f32 %v114, %v128
  %v131 = vld [vmem:[%s3] sm:$0xf]
  %v132 = vld [vmem:[%s3 + $0x4] sm:$0xf]
  %v133 = vld [vmem:[%s3 + $0x8] sm:$0xf]
  %v134 = vld [vmem:[%s3 + $0xc] sm:$0xf]
  %v139 = vunpack.c.l.b16 %v131
  %v140 = vunpack.c.l.b16 %v132
  %v141 = vunpack.c.l.b16 %v133
  %v142 = vunpack.c.l.b16 %v134
  %v143 = vpack.c.b16 %v140, %v139
  %v144 = vpack.c.b16 %v142, %v141
  %147 = vmatprep.subr.bf16.mxu0 0
  %148 = vmatpush1.bf16.msra.mxu0 0
  %149 = vmatprep.subr.bf16.mxu0 0
  %150 = vmatpush1.bf16.msra.mxu0 0
  %151 = vmatprep.subr.bf16.mxu0 0
  %152 = vmatpush1.bf16.msra.mxu0 0
  %153 = vmatprep.subr.bf16.mxu0 0
  %154 = vmatpush1.bf16.msra.mxu0 0
  %155 = vmatprep.subr.bf16.mxu0 0
  %156 = vmatpush1.bf16.msra.mxu0 0
  %157 = vmatprep.subr.bf16.mxu0 0
  %158 = vmatpush1.bf16.msra.mxu0 0
  %159 = vmatprep.subr.bf16.mxu0 0
  %160 = vmatpush1.bf16.msra.mxu0 %v144
  %161 = vmatprep.subr.bf16.mxu0 0
  %162 = vmatpush1.bf16.msra.mxu0 %v143
  %163 = vmatprep.subr.bf16.mxu0 0
  %164 = vmatpush2.bf16.msra.mxu0 0
  %165 = vmatprep.subr.bf16.mxu0 0
  %166 = vmatpush2.bf16.msra.mxu0 0
  %167 = vmatprep.subr.bf16.mxu0 0
  %168 = vmatpush2.bf16.msra.mxu0 0
  %169 = vmatprep.subr.bf16.mxu0 0
  %170 = vmatpush2.bf16.msra.mxu0 0
  %171 = vmatprep.subr.bf16.mxu0 0
  %172 = vmatpush2.bf16.msra.mxu0 0
  %173 = vmatprep.subr.bf16.mxu0 0
  %174 = vmatpush2.bf16.msra.mxu0 0
  %175 = vmatprep.subr.bf16.mxu0 0
  %176 = vmatpush2.bf16.msra.mxu0 0
  %177 = vmatprep.subr.bf16.mxu0 0
  %178 = vmatpush2.bf16.msra.mxu0 0
  %179 = vmatprep.mubr.bf16.mxu0 0
  %180 = vmatmul.mubr.bf16.gmra.mxu0 %v70
  %v181 = vpop.f32.mrf.mxu0
  %v182 = vadd.f32 0.0, %v181
  %v183 = vpop.f32.mrf.mxu0
  %v184 = vpop.f32.mrf.mxu0
  %v185 = vadd.f32 0.0, %v184
  %v186 = vpop.f32.mrf.mxu0
  %187 = vdwg.mxu0
  %v188 = vmul.f32 %v129, %v182
  %v189 = vmul.f32 %v130, %v185
  %v190 = vpack.c.bf16 %v189, %v188
  %v191 = vld [vmem:[%s4] sm:$0xf]
  %v192 = vld [vmem:[%s4 + $0x4] sm:$0xf]
  %v193 = vld [vmem:[%s4 + $0x8] sm:$0xf]
  %v194 = vld [vmem:[%s4 + $0xc] sm:$0xf]
  %v195 = vld [vmem:[%s4 + $0x10] sm:$0xf]
  %v196 = vld [vmem:[%s4 + $0x14] sm:$0xf]
  %v197 = vld [vmem:[%s4 + $0x18] sm:$0xf]
  %v198 = vld [vmem:[%s4 + $0x1c] sm:$0xf]
  %v207 = vunpack.c.l.b16 %v191
  %v208 = vunpack.c.l.b16 %v192
  %v209 = vunpack.c.l.b16 %v193
  %v210 = vunpack.c.l.b16 %v194
  %v211 = vunpack.c.l.b16 %v195
  %v212 = vunpack.c.l.b16 %v196
  %v213 = vunpack.c.l.b16 %v197
  %v214 = vunpack.c.l.b16 %v198
  %v215 = vpack.c.b16 %v208, %v207
  %v216 = vpack.c.b16 %v210, %v209
  %v217 = vpack.c.b16 %v212, %v211
  %v218 = vpack.c.b16 %v214, %v213
  %vm223 = vcmask 523264
  %v225 = vsel %vm223, %v190, 0
  %227 = vmatprep.subr.bf16.mxu0 0
  %228 = vmatpush1.bf16.msra.mxu0 0
  %229 = vmatprep.subr.bf16.mxu0 0
  %230 = vmatpush1.bf16.msra.mxu0 0
  %231 = vmatprep.subr.bf16.mxu0 0
  %232 = vmatpush1.bf16.msra.mxu0 0
  %233 = vmatprep.subr.bf16.mxu0 0
  %234 = vmatpush1.bf16.msra.mxu0 0
  %235 = vmatprep.subr.bf16.mxu0 0
  %236 = vmatpush1.bf16.msra.mxu0 %v218
  %237 = vmatprep.subr.bf16.mxu0 0
  %238 = vmatpush1.bf16.msra.mxu0 %v217
  %239 = vmatprep.subr.bf16.mxu0 0
  %240 = vmatpush1.bf16.msra.mxu0 %v216
  %241 = vmatprep.subr.bf16.mxu0 0
  %242 = vmatpush1.bf16.msra.mxu0 %v215
  %243 = vmatprep.subr.bf16.mxu0 0
  %244 = vmatpush2.bf16.msra.mxu0 0
  %245 = vmatprep.subr.bf16.mxu0 0
  %246 = vmatpush2.bf16.msra.mxu0 0
  %247 = vmatprep.subr.bf16.mxu0 0
  %248 = vmatpush2.bf16.msra.mxu0 0
  %249 = vmatprep.subr.bf16.mxu0 0
  %250 = vmatpush2.bf16.msra.mxu0 0
  %251 = vmatprep.subr.bf16.mxu0 0
  %252 = vmatpush2.bf16.msra.mxu0 0
  %253 = vmatprep.subr.bf16.mxu0 0
  %254 = vmatpush2.bf16.msra.mxu0 0
  %255 = vmatprep.subr.bf16.mxu0 0
  %256 = vmatpush2.bf16.msra.mxu0 0
  %257 = vmatprep.subr.bf16.mxu0 0
  %258 = vmatpush2.bf16.msra.mxu0 0
  %259 = vmatprep.mubr.bf16.mxu0 0
  %260 = vmatmul.mubr.bf16.gmra.mxu0 %v225
  %v261 = vpop.f32.mrf.mxu0
  %v262 = vadd.f32 0.0, %v261
  %v263 = vpop.f32.mrf.mxu0
  %v264 = vpop.f32.mrf.mxu0
  %v265 = vadd.f32 0.0, %v264
  %v266 = vpop.f32.mrf.mxu0
  %267 = vdwg.mxu0
  %v268 = vadd.f32 %v23, %v262
  %v269 = vadd.f32 %v24, %v265
  %v270 = vpack.c.bf16 %v269, %v268
  %v272 = vunpack.c.l.b16 %v270
  %v273 = vunpack.c.h.b16 %v270
  %v274 = vpack.c.b16 %v272, %v272
  %v275 = vpack.c.b16 %v273, %v273
  %vm278 = vcmask 257024
  %279 = vst.msk [vmem:[%s5] sm:$0xf] %vm278, %v274
  %280 = vst.msk [vmem:[%s5 + $0x4] sm:$0xf] %vm278, %v275
  // Predicated region
  $region22: #{gemma_forward.9} parent=0 // pred_check
    _
  $region23: #{gemma_forward.9} parent=0 // pred_check_branch
    %282 = sbr.rel (0) target = $region25
  $region24: #{gemma_forward.9} parent=0 // pred_region
    _
  $region25: #{gemma_forward.9} parent=0 // pred_fallthru
    _
  // Predicated region
  $region26: #{gemma_forward.9} parent=0 // pred_check
    _
  $region27: #{gemma_forward.9} parent=0 // pred_check_branch
    %284 = sbr.rel (0) target = $region29
  $region28: #{gemma_forward.9} parent=0 // pred_region
    _
  $region29: #{gemma_forward.9} parent=0 // pred_fallthru
    _

// kernel: gemma_forward.8
$region0: #{gemma_forward.8}
  #allocation0 [shape = 'u32[]', space=smem, size = 0x4, offset = 0x4, fixed_abs, tag = 'smem constant byte address 0x4 - core index']
  #allocation1 [shape = 'u32[144,128]{1,0:T(1,128)}', space=vmem, size = 0x12000, scoped, tag = 'internal scratch']
  %s0 = inlined_call_operand.vmem [shape: s32[8,1], index: 0, kind: input, shape index: {}]
  %s1 = inlined_call_operand.vmem [shape: bf16[2,8,64], index: 1, kind: input, shape index: {}]
  %s2 = inlined_call_operand.vmem [shape: bf16[2,16,32], index: 2, kind: input, shape index: {}]
  %s3 = inlined_call_operand.vmem [shape: bf16[2,16,32], index: 3, kind: input, shape index: {}]
  %s4 = inlined_call_operand.vmem [shape: bf16[64,32], index: 4, kind: input, shape index: {}]
  %s5 = inlined_call_operand.vmem [shape: bf16[2,8,32], index: 5, kind: input, shape index: {}]
  %s6 = inlined_call_operand.vmem [shape: bf16[2,8,32], index: 6, kind: output, shape index: {}]
  %s7 = sld [smem:[#allocation0]]
  $region57: #{gemma_forward.8} parent=0
    _
  %s9 = ssub.s32 1, %s7
  %s10 = scalar_select 0, %s9, %s7
  loop: start=0, step=1, limit=4
  $region2: #{gemma_forward.8} parent=0 // loop_pre_header
    _
  $region3: #{gemma_forward.8} parent=0 // loop_header
    %s12 = sphi 0, %s16
    %p13 = scmp.ge.s32.totalorder %s12, 4
    %s20 = sphi 0, %s20
    %s22 = sphi 0, %s20
    %s23 = sphi 0, %s22
    %s37 = sphi 0, %s23
    %s43 = sphi 0, %s45
    %s46 = sphi 0, %s43
    %s47 = sphi 0, %s46
    %s63 = sphi 0, %s47
    %s69 = sphi 0, %s71
    %s72 = sphi 0, %s69
    %s73 = sphi 0, %s72
    %s89 = sphi 0, %s73
    %s95 = sphi 0, %s97
    %s98 = sphi 0, %s95
    %s99 = sphi 0, %s98
    %s115 = sphi 0, %s99
    %s119 = sphi 0, %s119
    %s121 = sphi 0, %s119
    %s122 = sphi 0, %s121
    %s136 = sphi 0, %s122
    %s142 = sphi 0, %s144
    %s145 = sphi 0, %s142
    %s146 = sphi 0, %s145
    %s162 = sphi 0, %s146
    %s168 = sphi 0, %s170
    %s171 = sphi 0, %s168
    %s172 = sphi 0, %s171
    %s188 = sphi 0, %s172
  $region4: #{gemma_forward.8} parent=0 // loop_header_branch
    %15 = sbr.rel (%p13) target = $region8
  $region5: #{gemma_forward.8} parent=0 // loop_body
    %s17 = ssub.s32 %s12, 1
    %s18 = ssub.s32 %s12, 2
    %s19 = sadd.s32 %s12, 1
    %s21 = sadd.s32 %s20, 1
    %p24 = scmp.eq.s32.totalorder %s12, 1
    %p25 = scmp.ne.s32.totalorder %s20, %s22
    %p26 = scmp.eq.s32.totalorder %s12, 0
    %p27 = por %p25, %p26
    %p28 = scmp.ne.s32.totalorder %s20, %s22
    %p29 = scmp.eq.s32.totalorder %s17, 1
    %p30 = por %p28, %p29
    %p31 = scmp.ne.s32.totalorder %s22, %s23
    %p32 = scmp.eq.s32.totalorder %s17, 0
    %p33 = por %p31, %p32
    %p34 = scmp.ne.s32.totalorder %s22, %s23
    %p35 = scmp.eq.s32.totalorder %s18, 1
    %p36 = por %p34, %p35
    %p38 = scmp.ne.s32.totalorder %s23, %s37
    %p39 = scmp.eq.s32.totalorder %s18, 0
    %p40 = por %p38, %p39
    %s41 = ssub.s32 %s12, %s19
    %p42 = scmp.eq.s32.totalorder %s41, 0
    %s44 = sadd.s32 %s43, 1
    %s45 = scalar_select %p42, %s43, %s44
    %p48 = pneg %p42
    %p49 = scmp.eq.s32.totalorder %s12, 1
    %p50 = por %p48, %p49
    %p51 = scmp.ne.s32.totalorder %s43, %s46
    %p52 = scmp.eq.s32.totalorder %s12, 0
    %p53 = por %p51, %p52
    %p54 = scmp.ne.s32.totalorder %s43, %s46
    %p55 = scmp.eq.s32.totalorder %s17, 1
    %p56 = por %p54, %p55
    %p57 = scmp.ne.s32.totalorder %s46, %s47
    %p58 = scmp.eq.s32.totalorder %s17, 0
    %p59 = por %p57, %p58
    %p60 = scmp.ne.s32.totalorder %s46, %s47
    %p61 = scmp.eq.s32.totalorder %s18, 1
    %p62 = por %p60, %p61
    %p64 = scmp.ne.s32.totalorder %s47, %s63
    %p65 = scmp.eq.s32.totalorder %s18, 0
    %p66 = por %p64, %p65
    %s67 = ssub.s32 %s12, %s19
    %p68 = scmp.eq.s32.totalorder %s67, 0
    %s70 = sadd.s32 %s69, 1
    %s71 = scalar_select %p68, %s69, %s70
    %p74 = pneg %p68
    %p75 = scmp.eq.s32.totalorder %s12, 1
    %p76 = por %p74, %p75
    %p77 = scmp.ne.s32.totalorder %s69, %s72
    %p78 = scmp.eq.s32.totalorder %s12, 0
    %p79 = por %p77, %p78
    %p80 = scmp.ne.s32.totalorder %s69, %s72
    %p81 = scmp.eq.s32.totalorder %s17, 1
    %p82 = por %p80, %p81
    %p83 = scmp.ne.s32.totalorder %s72, %s73
    %p84 = scmp.eq.s32.totalorder %s17, 0
    %p85 = por %p83, %p84
    %p86 = scmp.ne.s32.totalorder %s72, %s73
    %p87 = scmp.eq.s32.totalorder %s18, 1
    %p88 = por %p86, %p87
    %p90 = scmp.ne.s32.totalorder %s73, %s89
    %p91 = scmp.eq.s32.totalorder %s18, 0
    %p92 = por %p90, %p91
    %s93 = ssub.s32 %s12, %s19
    %p94 = scmp.eq.s32.totalorder %s93, 0
    %s96 = sadd.s32 %s95, 1
    %s97 = scalar_select %p94, %s95, %s96
    %p100 = pneg %p94
    %p101 = scmp.eq.s32.totalorder %s12, 1
    %p102 = por %p100, %p101
    %p103 = scmp.ne.s32.totalorder %s95, %s98
    %p104 = scmp.eq.s32.totalorder %s12, 0
    %p105 = por %p103, %p104
    %p106 = scmp.ne.s32.totalorder %s95, %s98
    %p107 = scmp.eq.s32.totalorder %s17, 1
    %p108 = por %p106, %p107
    %p109 = scmp.ne.s32.totalorder %s98, %s99
    %p110 = scmp.eq.s32.totalorder %s17, 0
    %p111 = por %p109, %p110
    %p112 = scmp.ne.s32.totalorder %s98, %s99
    %p113 = scmp.eq.s32.totalorder %s18, 1
    %p114 = por %p112, %p113
    %p116 = scmp.ne.s32.totalorder %s99, %s115
    %p117 = scmp.eq.s32.totalorder %s18, 0
    %p118 = por %p116, %p117
    %s120 = sadd.s32 %s119, 1
    %p123 = scmp.eq.s32.totalorder %s12, 1
    %p124 = scmp.ne.s32.totalorder %s119, %s121
    %p125 = scmp.eq.s32.totalorder %s12, 0
    %p126 = por %p124, %p125
    %p127 = scmp.ne.s32.totalorder %s119, %s121
    %p128 = scmp.eq.s32.totalorder %s17, 1
    %p129 = por %p127, %p128
    %p130 = scmp.ne.s32.totalorder %s121, %s122
    %p131 = scmp.eq.s32.totalorder %s17, 0
    %p132 = por %p130, %p131
    %p133 = scmp.ne.s32.totalorder %s121, %s122
    %p134 = scmp.eq.s32.totalorder %s18, 1
    %p135 = por %p133, %p134
    %p137 = scmp.ne.s32.totalorder %s122, %s136
    %p138 = scmp.eq.s32.totalorder %s18, 0
    %p139 = por %p137, %p138
    %s140 = ssub.s32 %s12, %s19
    %p141 = scmp.eq.s32.totalorder %s140, 0
    %s143 = sadd.s32 %s142, 1
    %s144 = scalar_select %p141, %s142, %s143
    %p147 = pneg %p141
    %p148 = scmp.eq.s32.totalorder %s12, 1
    %p149 = por %p147, %p148
    %p150 = scmp.ne.s32.totalorder %s142, %s145
    %p151 = scmp.eq.s32.totalorder %s12, 0
    %p152 = por %p150, %p151
    %p153 = scmp.ne.s32.totalorder %s142, %s145
    %p154 = scmp.eq.s32.totalorder %s17, 1
    %p155 = por %p153, %p154
    %p156 = scmp.ne.s32.totalorder %s145, %s146
    %p157 = scmp.eq.s32.totalorder %s17, 0
    %p158 = por %p156, %p157
    %p159 = scmp.ne.s32.totalorder %s145, %s146
    %p160 = scmp.eq.s32.totalorder %s18, 1
    %p161 = por %p159, %p160
    %p163 = scmp.ne.s32.totalorder %s146, %s162
    %p164 = scmp.eq.s32.totalorder %s18, 0
    %p165 = por %p163, %p164
    %s166 = ssub.s32 %s12, %s19
    %p167 = scmp.eq.s32.totalorder %s166, 0
    %s169 = sadd.s32 %s168, 1
    %s170 = scalar_select %p167, %s168, %s169
    %p173 = pneg %p167
    %p174 = scmp.eq.s32.totalorder %s12, 1
    %p175 = por %p173, %p174
    %p176 = scmp.ne.s32.totalorder %s168, %s171
    %p177 = scmp.eq.s32.totalorder %s12, 0
    %p178 = por %p176, %p177
    %p179 = scmp.ne.s32.totalorder %s168, %s171
    %p180 = scmp.eq.s32.totalorder %s17, 1
    %p181 = por %p179, %p180
    %p182 = scmp.ne.s32.totalorder %s171, %s172
    %p183 = scmp.eq.s32.totalorder %s17, 0
    %p184 = por %p182, %p183
    %p185 = scmp.ne.s32.totalorder %s171, %s172
    %p186 = scmp.eq.s32.totalorder %s18, 1
    %p187 = por %p185, %p186
    %p189 = scmp.ne.s32.totalorder %s172, %s188
    %p190 = scmp.eq.s32.totalorder %s18, 0
    %p191 = por %p189, %p190
    %p192 = scmp.le.s32.totalorder 1, %s12
    %p193 = scmp.lt.s32.totalorder %s12, 3
    %p194 = pnand %p192, %p193
    %p195 = pneg %p194
    // Predicated region
    $region9: #{gemma_forward.8} parent=5 // pred_check
      _
    $region10: #{gemma_forward.8} parent=5 // pred_check_branch
      %197 = sbr.rel (%p194) target = $region12
    $region11: #{gemma_forward.8} parent=5 // pred_region
      %s198 = ssub.s32 %s12, 1
      // Predicated region
      $region13: #{gemma_forward.8} parent=11 // pred_check
        %p199 = pneg %p33
      $region14: #{gemma_forward.8} parent=11 // pred_check_branch
        %201 = sbr.rel (%p199) target = $region16
      $region15: #{gemma_forward.8} parent=11 // pred_region
        _
      $region16: #{gemma_forward.8} parent=11 // pred_fallthru
        _
      // Predicated region
      $region17: #{gemma_forward.8} parent=11 // pred_check
        %p202 = pneg %p132
      $region18: #{gemma_forward.8} parent=11 // pred_check_branch
        %204 = sbr.rel (%p202) target = $region20
      $region19: #{gemma_forward.8} parent=11 // pred_region
        _
      $region20: #{gemma_forward.8} parent=11 // pred_fallthru
        _
    $region12: #{gemma_forward.8} parent=5 // pred_fallthru
      _
    %p205 = scmp.lt.s32.totalorder %s12, 2
    // Predicated region
    $region21: #{gemma_forward.8} parent=5 // pred_check
      %p206 = pneg %p205
    $region22: #{gemma_forward.8} parent=5 // pred_check_branch
      %208 = sbr.rel (%p206) target = $region24
    $region23: #{gemma_forward.8} parent=5 // pred_region
      // Predicated region
      $region25: #{gemma_forward.8} parent=23 // pred_check
        %p209 = pneg %p53
      $region26: #{gemma_forward.8} parent=23 // pred_check_branch
        %211 = sbr.rel (%p209) target = $region28
      $region27: #{gemma_forward.8} parent=23 // pred_region
        %p212 = scmp.lt.s32.totalorder %s12, 1
        %s213 = scalar_select %p212, %s12, 1
        %s214 = smul.addr %s213, 4
        %s215 = scalar_lea.vmem %s1, %s214
      $region28: #{gemma_forward.8} parent=23 // pred_fallthru
        _
      // Predicated region
      $region29: #{gemma_forward.8} parent=23 // pred_check
        %p216 = pneg %p79
      $region30: #{gemma_forward.8} parent=23 // pred_check_branch
        %218 = sbr.rel (%p216) target = $region32
      $region31: #{gemma_forward.8} parent=23 // pred_region
        %p219 = scmp.lt.s32.totalorder %s12, 1
        %s220 = scalar_select %p219, %s12, 1
        %s221 = smul.addr %s220, 2
        %s222 = smul.addr %s221, 4
        %s223 = scalar_lea.vmem %s2, %s222
      $region32: #{gemma_forward.8} parent=23 // pred_fallthru
        _
      // Predicated region
      $region33: #{gemma_forward.8} parent=23 // pred_check
        %p224 = pneg %p105
      $region34: #{gemma_forward.8} parent=23 // pred_check_branch
        %226 = sbr.rel (%p224) target = $region36
      $region35: #{gemma_forward.8} parent=23 // pred_region
        %p227 = scmp.lt.s32.totalorder %s12, 1
        %s228 = scalar_select %p227, %s12, 1
        %s229 = smul.addr %s228, 2
        %s230 = smul.addr %s229, 4
        %s231 = scalar_lea.vmem %s3, %s230
      $region36: #{gemma_forward.8} parent=23 // pred_fallthru
        _
      // Predicated region
      $region37: #{gemma_forward.8} parent=23 // pred_check
        %p232 = pneg %p152
      $region38: #{gemma_forward.8} parent=23 // pred_check_branch
        %234 = sbr.rel (%p232) target = $region40
      $region39: #{gemma_forward.8} parent=23 // pred_region
        %p235 = scmp.lt.s32.totalorder %s12, 1
        %s236 = scalar_select %p235, %s12, 1
        %s237 = smul.addr %s236, 4
        %s238 = scalar_lea.vmem %s5, %s237
      $region40: #{gemma_forward.8} parent=23 // pred_fallthru
        _
    $region24: #{gemma_forward.8} parent=5 // pred_fallthru
      _
    %p239 = scmp.le.s32.totalorder 1, %s12
    %p240 = scmp.lt.s32.totalorder %s12, 3
    %p241 = pnand %p239, %p240
    %p242 = pneg %p241
    // Predicated region
    $region41: #{gemma_forward.8} parent=5 // pred_check
      _
    $region42: #{gemma_forward.8} parent=5 // pred_check_branch
      %244 = sbr.rel (%p241) target = $region44
    $region43: #{gemma_forward.8} parent=5 // pred_region
      %s245 = ssub.s32 %s12, 1
      %p246 = pneg %p33
      %p247 = pneg %p30
      %p248 = scmp.lt.s32.totalorder %s17, 1
      %s249 = scalar_select %p248, %s17, 1
      %s250 = smul.addr %s249, 4
      %s251 = scalar_lea.vmem %s1, %s250
      %p252 = pneg %p59
      %p253 = pneg %p56
      %p254 = scmp.lt.s32.totalorder %s17, 1
      %s255 = scalar_select %p254, %s17, 1
      %s256 = smul.addr %s255, 2
      %s257 = smul.addr %s256, 4
      %s258 = scalar_lea.vmem %s2, %s257
      %p259 = pneg %p85
      %p260 = pneg %p82
      %p261 = scmp.lt.s32.totalorder %s17, 1
      %s262 = scalar_select %p261, %s17, 1
      %s263 = smul.addr %s262, 2
      %s264 = smul.addr %s263, 4
      %s265 = scalar_lea.vmem %s3, %s264
      %p266 = pneg %p111
      %p267 = pneg %p108
      %p268 = pneg %p132
      %p269 = pneg %p129
      %p270 = scmp.lt.s32.totalorder %s17, 1
      %s271 = scalar_select %p270, %s17, 1
      %s272 = smul.addr %s271, 4
      %s273 = scalar_lea.vmem %s5, %s272
      %p274 = pneg %p158
      %p275 = pneg %p155
      %p276 = pneg %p184
      %p277 = pneg %p181
      %p278 = scmp.lt.s32.totalorder %s17, 1
      %s279 = scalar_select %p278, %s17, 1
      %s280 = smul.addr %s279, 4
      %s281 = scalar_lea.vmem %s6, %s280
      %p282 = scmp.lt.s32.totalorder %s17, 1
      %s283 = scalar_select %p282, %s17, 1
      %s284 = smul.addr %s283, 4
      %s285 = scalar_lea.vmem %s1, %s284
      %p286 = scmp.lt.s32.totalorder %s17, 1
      %s287 = scalar_select %p286, %s17, 1
      %s288 = smul.addr %s287, 2
      %s289 = smul.addr %s288, 4
      %s290 = scalar_lea.vmem %s2, %s289
      %p291 = scmp.lt.s32.totalorder %s17, 1
      %s292 = scalar_select %p291, %s17, 1
      %s293 = smul.addr %s292, 2
      %s294 = smul.addr %s293, 4
      %s295 = scalar_lea.vmem %s3, %s294
      %p296 = scmp.lt.s32.totalorder %s17, 1
      %s297 = scalar_select %p296, %s17, 1
      %s298 = smul.addr %s297, 4
      %s299 = scalar_lea.vmem %s5, %s298
      %p300 = scmp.lt.s32.totalorder %s17, 1
      %s301 = scalar_select %p300, %s17, 1
      %s302 = smul.addr %s301, 4
      %s303 = scalar_lea.vmem %s6, %s302
      %v305 = vlaneseq
      %v306 = vand.u32 %v305, 127
      %v307 = vld [vmem:[%s0] sm:$0xff]
      %308 = vset.pattern.permute.xlu0 0
      %309 = vperm.xlu0 %308, %v307
      %v310 = vpop.permute.xlu0 %309
      %vm311 = vcmp.le.s32.totalorder %v306, %v310
      %v312 = vsel %vm311, 0.0, -2.3819763e+38
      %v313 = vld [vmem:[%s285] sm:$0xf]
      %v314 = vld [vmem:[%s290] sm:$0xf]
      %v315 = vld [vmem:[%s290 + $0x4] sm:$0xf]
      %v316 = vld [vmem:[%s295] sm:$0xf]
      %v317 = vld [vmem:[%s295 + $0x4] sm:$0xf]
      %v320 = vunpack.c.l.b16 %v314
      %v321 = vunpack.c.l.b16 %v315
      %v322 = vpack.c.b16 %v321, %v320
      %vm323 = vcmask 130048
      %v325 = vsel %vm323, %v313, 0
      %v328 = vsel %vm323, %v322, 0
      %330 = vmatprep.subr.bf16.mxu0 0
      %331 = vmatpush1.bf16.xpose.msra.mxu0 0
      %332 = vmatprep.subr.bf16.mxu0 0
      %333 = vmatpush1.bf16.xpose.msra.mxu0 0
      %334 = vmatprep.subr.bf16.mxu0 0
      %335 = vmatpush1.bf16.xpose.msra.mxu0 0
      %336 = vmatprep.subr.bf16.mxu0 0
      %337 = vmatpush1.bf16.xpose.msra.mxu0 0
      %338 = vmatprep.subr.bf16.mxu0 0
      %339 = vmatpush1.bf16.xpose.msra.mxu0 0
      %340 = vmatprep.subr.bf16.mxu0 0
      %341 = vmatpush1.bf16.xpose.msra.mxu0 0
      %342 = vmatprep.subr.bf16.mxu0 0
      %343 = vmatpush1.bf16.xpose.msra.mxu0 0
      %344 = vmatprep.subr.bf16.mxu0 0
      %345 = vmatpush1.bf16.xpose.msra.mxu0 %v328
      %346 = vmatprep.subr.bf16.mxu0 0
      %347 = vmatpush2.bf16.xpose.msra.mxu0 0
      %348 = vmatprep.subr.bf16.mxu0 0
      %349 = vmatpush2.bf16.xpose.msra.mxu0 0
      %350 = vmatprep.subr.bf16.mxu0 0
      %351 = vmatpush2.bf16.xpose.msra.mxu0 0
      %352 = vmatprep.subr.bf16.mxu0 0
      %353 = vmatpush2.bf16.xpose.msra.mxu0 0
      %354 = vmatprep.subr.bf16.mxu0 0
      %355 = vmatpush2.bf16.xpose.msra.mxu0 0
      %356 = vmatprep.subr.bf16.mxu0 0
      %357 = vmatpush2.bf16.xpose.msra.mxu0 0
      %358 = vmatprep.subr.bf16.mxu0 0
      %359 = vmatpush2.bf16.xpose.msra.mxu0 0
      %360 = vmatprep.subr.bf16.mxu0 0
      %361 = vmatpush2.bf16.xpose.msra.mxu0 0
      %362 = vmatprep.mubr.bf16.mxu0 0
      %363 = vmatmul.mubr.bf16.gmra.mxu0 %v325
      %v364 = vpop.f32.mrf.mxu0
      %v365 = vadd.f32 0.0, %v364
      %v366 = vpop.f32.mrf.mxu0
      %v367 = vpop.f32.mrf.mxu0
      %v368 = vpop.f32.mrf.mxu0
      %369 = vdwg.mxu0
      %v370 = vmul.f32 %v365, 0.25
      %v371 = vadd.f32 %v370, %v312
      %v372 = vsel %vm323, %v371, -inf
      %373 = vmax.xlane.f32.xlu0 %v372
      %v374 = vpop.xlane.xlu0 %373
      %v375 = vsub.f32 %v371, %v374
      %v376 = vmul.f32 %v375, 1.442695
      %v377 = vpow.pop %v376
      %v378 = vsel %vm323, %v377, 0.0
      %379 = vadd.xlane.f32.xlu0 %v378
      %v380 = vpop.xlane.xlu0 %379
      %v381 = vrcp.pop %v380
      %v382 = vmul.f32 %v377, %v381
      %v383 = vpack.c.bf16 %v382, %v382
      %v386 = vunpack.c.l.b16 %v316
      %v387 = vunpack.c.l.b16 %v317
      %v388 = vpack.c.b16 %v387, %v386
      %v391 = vsel %vm323, %v383, 0
      %393 = vmatprep.subr.bf16.mxu0 0
      %394 = vmatpush1.bf16.msra.mxu0 0
      %395 = vmatprep.subr.bf16.mxu0 0
      %396 = vmatpush1.bf16.msra.mxu0 0
      %397 = vmatprep.subr.bf16.mxu0 0
      %398 = vmatpush1.bf16.msra.mxu0 0
      %399 = vmatprep.subr.bf16.mxu0 0
      %400 = vmatpush1.bf16.msra.mxu0 0
      %401 = vmatprep.subr.bf16.mxu0 0
      %402 = vmatpush1.bf16.msra.mxu0 0
      %403 = vmatprep.subr.bf16.mxu0 0
      %404 = vmatpush1.bf16.msra.mxu0 0
      %405 = vmatprep.subr.bf16.mxu0 0
      %406 = vmatpush1.bf16.msra.mxu0 0
      %407 = vmatprep.subr.bf16.mxu0 0
      %408 = vmatpush1.bf16.msra.mxu0 %v388
      %409 = vmatprep.subr.bf16.mxu0 0
      %410 = vmatpush2.bf16.msra.mxu0 0
      %411 = vmatprep.subr.bf16.mxu0 0
      %412 = vmatpush2.bf16.msra.mxu0 0
      %413 = vmatprep.subr.bf16.mxu0 0
      %414 = vmatpush2.bf16.msra.mxu0 0
      %415 = vmatprep.subr.bf16.mxu0 0
      %416 = vmatpush2.bf16.msra.mxu0 0
      %417 = vmatprep.subr.bf16.mxu0 0
      %418 = vmatpush2.bf16.msra.mxu0 0
      %419 = vmatprep.subr.bf16.mxu0 0
      %420 = vmatpush2.bf16.msra.mxu0 0
      %421 = vmatprep.subr.bf16.mxu0 0
      %422 = vmatpush2.bf16.msra.mxu0 0
      %423 = vmatprep.subr.bf16.mxu0 0
      %424 = vmatpush2.bf16.msra.mxu0 0
      %425 = vmatprep.mubr.bf16.mxu0 0
      %426 = vmatmul.mubr.bf16.gmra.mxu0 %v391
      %v427 = vpop.f32.mrf.mxu0
      %v428 = vadd.f32 0.0, %v427
      %v429 = vpop.f32.mrf.mxu0
      %v430 = vpop.f32.mrf.mxu0
      %v431 = vpop.f32.mrf.mxu0
      %432 = vdwg.mxu0
      %v434 = vunpack.c.l.b16 %v313
      %v435 = vpack.c.b16 %v434, %v434
      %436 = vrot.lane.b32.xlu0 %v435, 112
      %v437 = vpop.permute.xlu0 %436
      %v439 = vsel %vm323, %v437, 0
      %441 = vmatprep.subr.bf16.mxu0 0
      %442 = vmatpush1.bf16.xpose.msra.mxu0 0
      %443 = vmatprep.subr.bf16.mxu0 0
      %444 = vmatpush1.bf16.xpose.msra.mxu0 0
      %445 = vmatprep.subr.bf16.mxu0 0
      %446 = vmatpush1.bf16.xpose.msra.mxu0 0
      %447 = vmatprep.subr.bf16.mxu0 0
      %448 = vmatpush1.bf16.xpose.msra.mxu0 0
      %449 = vmatprep.subr.bf16.mxu0 0
      %450 = vmatpush1.bf16.xpose.msra.mxu0 0
      %451 = vmatprep.subr.bf16.mxu0 0
      %452 = vmatpush1.bf16.xpose.msra.mxu0 0
      %453 = vmatprep.subr.bf16.mxu0 0
      %454 = vmatpush1.bf16.xpose.msra.mxu0 0
      %455 = vmatprep.subr.bf16.mxu0 0
      %456 = vmatpush1.bf16.xpose.msra.mxu0 %v328
      %457 = vmatprep.subr.bf16.mxu0 0
      %458 = vmatpush2.bf16.xpose.msra.mxu0 0
      %459 = vmatprep.subr.bf16.mxu0 0
      %460 = vmatpush2.bf16.xpose.msra.mxu0 0
      %461 = vmatprep.subr.bf16.mxu0 0
      %462 = vmatpush2.bf16.xpose.msra.mxu0 0
      %463 = vmatprep.subr.bf16.mxu0 0
      %464 = vmatpush2.bf16.xpose.msra.mxu0 0
      %465 = vmatprep.subr.bf16.mxu0 0
      %466 = vmatpush2.bf16.xpose.msra.mxu0 0
      %467 = vmatprep.subr.bf16.mxu0 0
      %468 = vmatpush2.bf16.xpose.msra.mxu0 0
      %469 = vmatprep.subr.bf16.mxu0 0
      %470 = vmatpush2.bf16.xpose.msra.mxu0 0
      %471 = vmatprep.subr.bf16.mxu0 0
      %472 = vmatpush2.bf16.xpose.msra.mxu0 0
      %473 = vmatprep.mubr.bf16.mxu0 0
      %474 = vmatmul.mubr.bf16.gmra.mxu0 %v439
      %v475 = vpop.f32.mrf.mxu0
      %v476 = vadd.f32 0.0, %v475
      %v477 = vpop.f32.mrf.mxu0
      %v478 = vpop.f32.mrf.mxu0
      %v479 = vpop.f32.mrf.mxu0
      %480 = vdwg.mxu0
      %v481 = vmul.f32 %v476, 0.25
      %v482 = vadd.f32 %v481, %v312
      %v483 = vsel %vm323, %v482, -inf
      %484 = vmax.xlane.f32.xlu0 %v483
      %v485 = vpop.xlane.xlu0 %484
      %v486 = vsub.f32 %v482, %v485
      %v487 = vmul.f32 %v486, 1.442695
      %v488 = vpow.pop %v487
      %v489 = vsel %vm323, %v488, 0.0
      %490 = vadd.xlane.f32.xlu0 %v489
      %v491 = vpop.xlane.xlu0 %490
      %v492 = vrcp.pop %v491
      %v493 = vmul.f32 %v488, %v492
      %v494 = vpack.c.bf16 %v493, %v493
      %v496 = vsel %vm323, %v494, 0
      %498 = vmatprep.subr.bf16.mxu0 0
      %499 = vmatpush1.bf16.msra.mxu0 0
      %500 = vmatprep.subr.bf16.mxu0 0
      %501 = vmatpush1.bf16.msra.mxu0 0
      %502 = vmatprep.subr.bf16.mxu0 0
      %503 = vmatpush1.bf16.msra.mxu0 0
      %504 = vmatprep.subr.bf16.mxu0 0
      %505 = vmatpush1.bf16.msra.mxu0 0
      %506 = vmatprep.subr.bf16.mxu0 0
      %507 = vmatpush1.bf16.msra.mxu0 0
      %508 = vmatprep.subr.bf16.mxu0 0
      %509 = vmatpush1.bf16.msra.mxu0 0
      %510 = vmatprep.subr.bf16.mxu0 0
      %511 = vmatpush1.bf16.msra.mxu0 0
      %512 = vmatprep.subr.bf16.mxu0 0
      %513 = vmatpush1.bf16.msra.mxu0 %v388
      %514 = vmatprep.subr.bf16.mxu0 0
      %515 = vmatpush2.bf16.msra.mxu0 0
      %516 = vmatprep.subr.bf16.mxu0 0
      %517 = vmatpush2.bf16.msra.mxu0 0
      %518 = vmatprep.subr.bf16.mxu0 0
      %519 = vmatpush2.bf16.msra.mxu0 0
      %520 = vmatprep.subr.bf16.mxu0 0
      %521 = vmatpush2.bf16.msra.mxu0 0
      %522 = vmatprep.subr.bf16.mxu0 0
      %523 = vmatpush2.bf16.msra.mxu0 0
      %524 = vmatprep.subr.bf16.mxu0 0
      %525 = vmatpush2.bf16.msra.mxu0 0
      %526 = vmatprep.subr.bf16.mxu0 0
      %527 = vmatpush2.bf16.msra.mxu0 0
      %528 = vmatprep.subr.bf16.mxu0 0
      %529 = vmatpush2.bf16.msra.mxu0 0
      %530 = vmatprep.mubr.bf16.mxu0 0
      %531 = vmatmul.mubr.bf16.gmra.mxu0 %v496
      %v532 = vpop.f32.mrf.mxu0
      %v533 = vadd.f32 0.0, %v532
      %v534 = vpop.f32.mrf.mxu0
      %v535 = vpop.f32.mrf.mxu0
      %v536 = vpop.f32.mrf.mxu0
      %537 = vdwg.mxu0
      %538 = vrot.lane.b32.xlu0 %v435, 96
      %v539 = vpop.permute.xlu0 %538
      %540 = vrot.lane.b32.xlu0 %v322, 112
      %v541 = vpop.permute.xlu0 %540
      %v543 = vsel %vm323, %v539, 0
      %v546 = vsel %vm323, %v541, 0
      %548 = vmatprep.subr.bf16.mxu0 0
      %549 = vmatpush1.bf16.xpose.msra.mxu0 0
      %550 = vmatprep.subr.bf16.mxu0 0
      %551 = vmatpush1.bf16.xpose.msra.mxu0 0
      %552 = vmatprep.subr.bf16.mxu0 0
      %553 = vmatpush1.bf16.xpose.msra.mxu0 0
      %554 = vmatprep.subr.bf16.mxu0 0
      %555 = vmatpush1.bf16.xpose.msra.mxu0 0
      %556 = vmatprep.subr.bf16.mxu0 0
      %557 = vmatpush1.bf16.xpose.msra.mxu0 0
      %558 = vmatprep.subr.bf16.mxu0 0
      %559 = vmatpush1.bf16.xpose.msra.mxu0 0
      %560 = vmatprep.subr.bf16.mxu0 0
      %561 = vmatpush1.bf16.xpose.msra.mxu0 0
      %562 = vmatprep.subr.bf16.mxu0 0
      %563 = vmatpush1.bf16.xpose.msra.mxu0 %v546
      %564 = vmatprep.subr.bf16.mxu0 0
      %565 = vmatpush2.bf16.xpose.msra.mxu0 0
      %566 = vmatprep.subr.bf16.mxu0 0
      %567 = vmatpush2.bf16.xpose.msra.mxu0 0
      %568 = vmatprep.subr.bf16.mxu0 0
      %569 = vmatpush2.bf16.xpose.msra.mxu0 0
      %570 = vmatprep.subr.bf16.mxu0 0
      %571 = vmatpush2.bf16.xpose.msra.mxu0 0
      %572 = vmatprep.subr.bf16.mxu0 0
      %573 = vmatpush2.bf16.xpose.msra.mxu0 0
      %574 = vmatprep.subr.bf16.mxu0 0
      %575 = vmatpush2.bf16.xpose.msra.mxu0 0
      %576 = vmatprep.subr.bf16.mxu0 0
      %577 = vmatpush2.bf16.xpose.msra.mxu0 0
      %578 = vmatprep.subr.bf16.mxu0 0
      %579 = vmatpush2.bf16.xpose.msra.mxu0 0
      %580 = vmatprep.mubr.bf16.mxu0 0
      %581 = vmatmul.mubr.bf16.gmra.mxu0 %v543
      %v582 = vpop.f32.mrf.mxu0
      %v583 = vadd.f32 0.0, %v582
      %v584 = vpop.f32.mrf.mxu0
      %v585 = vpop.f32.mrf.mxu0
      %v586 = vpop.f32.mrf.mxu0
      %587 = vdwg.mxu0
      %v588 = vmul.f32 %v583, 0.25
      %v589 = vadd.f32 %v588, %v312
      %v590 = vsel %vm323, %v589, -inf
      %591 = vmax.xlane.f32.xlu0 %v590
      %v592 = vpop.xlane.xlu0 %591
      %v593 = vsub.f32 %v589, %v592
      %v594 = vmul.f32 %v593, 1.442695
      %v595 = vpow.pop %v594
      %v596 = vsel %vm323, %v595, 0.0
      %597 = vadd.xlane.f32.xlu0 %v596
      %v598 = vpop.xlane.xlu0 %597
      %v599 = vrcp.pop %v598
      %v600 = vmul.f32 %v595, %v599
      %v601 = vpack.c.bf16 %v600, %v600
      %602 = vrot.lane.b32.xlu0 %v388, 112
      %v603 = vpop.permute.xlu0 %602
      %v606 = vsel %vm323, %v601, 0
      %608 = vmatprep.subr.bf16.mxu0 0
      %609 = vmatpush1.bf16.msra.mxu0 0
      %610 = vmatprep.subr.bf16.mxu0 0
      %611 = vmatpush1.bf16.msra.mxu0 0
      %612 = vmatprep.subr.bf16.mxu0 0
      %613 = vmatpush1.bf16.msra.mxu0 0
      %614 = vmatprep.subr.bf16.mxu0 0
      %615 = vmatpush1.bf16.msra.mxu0 0
      %616 = vmatprep.subr.bf16.mxu0 0
      %617 = vmatpush1.bf16.msra.mxu0 0
      %618 = vmatprep.subr.bf16.mxu0 0
      %619 = vmatpush1.bf16.msra.mxu0 0
      %620 = vmatprep.subr.bf16.mxu0 0
      %621 = vmatpush1.bf16.msra.mxu0 0
      %622 = vmatprep.subr.bf16.mxu0 0
      %623 = vmatpush1.bf16.msra.mxu0 %v603
      %624 = vmatprep.subr.bf16.mxu0 0
      %625 = vmatpush2.bf16.msra.mxu0 0
      %626 = vmatprep.subr.bf16.mxu0 0
      %627 = vmatpush2.bf16.msra.mxu0 0
      %628 = vmatprep.subr.bf16.mxu0 0
      %629 = vmatpush2.bf16.msra.mxu0 0
      %630 = vmatprep.subr.bf16.mxu0 0
      %631 = vmatpush2.bf16.msra.mxu0 0
      %632 = vmatprep.subr.bf16.mxu0 0
      %633 = vmatpush2.bf16.msra.mxu0 0
      %634 = vmatprep.subr.bf16.mxu0 0
      %635 = vmatpush2.bf16.msra.mxu0 0
      %636 = vmatprep.subr.bf16.mxu0 0
      %637 = vmatpush2.bf16.msra.mxu0 0
      %638 = vmatprep.subr.bf16.mxu0 0
      %639 = vmatpush2.bf16.msra.mxu0 0
      %640 = vmatprep.mubr.bf16.mxu0 0
      %641 = vmatmul.mubr.bf16.gmra.mxu0 %v606
      %v642 = vpop.f32.mrf.mxu0
      %v643 = vadd.f32 0.0, %v642
      %v644 = vpop.f32.mrf.mxu0
      %v645 = vpop.f32.mrf.mxu0
      %v646 = vpop.f32.mrf.mxu0
      %647 = vdwg.mxu0
      %648 = vrot.lane.b32.xlu0 %v435, 80
      %v649 = vpop.permute.xlu0 %648
      %v651 = vsel %vm323, %v649, 0
      %653 = vmatprep.subr.bf16.mxu0 0
      %654 = vmatpush1.bf16.xpose.msra.mxu0 0
      %655 = vmatprep.subr.bf16.mxu0 0
      %656 = vmatpush1.bf16.xpose.msra.mxu0 0
      %657 = vmatprep.subr.bf16.mxu0 0
      %658 = vmatpush1.bf16.xpose.msra.mxu0 0
      %659 = vmatprep.subr.bf16.mxu0 0
      %660 = vmatpush1.bf16.xpose.msra.mxu0 0
      %661 = vmatprep.subr.bf16.mxu0 0
      %662 = vmatpush1.bf16.xpose.msra.mxu0 0
      %663 = vmatprep.subr.bf16.mxu0 0
      %664 = vmatpush1.bf16.xpose.msra.mxu0 0
      %665 = vmatprep.subr.bf16.mxu0 0
      %666 = vmatpush1.bf16.xpose.msra.mxu0 0
      %667 = vmatprep.subr.bf16.mxu0 0
      %668 = vmatpush1.bf16.xpose.msra.mxu0 %v546
      %669 = vmatprep.subr.bf16.mxu0 0
      %670 = vmatpush2.bf16.xpose.msra.mxu0 0
      %671 = vmatprep.subr.bf16.mxu0 0
      %672 = vmatpush2.bf16.xpose.msra.mxu0 0
      %673 = vmatprep.subr.bf16.mxu0 0
      %674 = vmatpush2.bf16.xpose.msra.mxu0 0
      %675 = vmatprep.subr.bf16.mxu0 0
      %676 = vmatpush2.bf16.xpose.msra.mxu0 0
      %677 = vmatprep.subr.bf16.mxu0 0
      %678 = vmatpush2.bf16.xpose.msra.mxu0 0
      %679 = vmatprep.subr.bf16.mxu0 0
      %680 = vmatpush2.bf16.xpose.msra.mxu0 0
      %681 = vmatprep.subr.bf16.mxu0 0
      %682 = vmatpush2.bf16.xpose.msra.mxu0 0
      %683 = vmatprep.subr.bf16.mxu0 0
      %684 = vmatpush2.bf16.xpose.msra.mxu0 0
      %685 = vmatprep.mubr.bf16.mxu0 0
      %686 = vmatmul.mubr.bf16.gmra.mxu0 %v651
      %v687 = vpop.f32.mrf.mxu0
      %v688 = vadd.f32 0.0, %v687
      %v689 = vpop.f32.mrf.mxu0
      %v690 = vpop.f32.mrf.mxu0
      %v691 = vpop.f32.mrf.mxu0
      %692 = vdwg.mxu0
      %v693 = vmul.f32 %v688, 0.25
      %v694 = vadd.f32 %v693, %v312
      %v695 = vsel %vm323, %v694, -inf
      %696 = vmax.xlane.f32.xlu0 %v695
      %v697 = vpop.xlane.xlu0 %696
      %v698 = vsub.f32 %v694, %v697
      %v699 = vmul.f32 %v698, 1.442695
      %v700 = vpow.pop %v699
      %v701 = vsel %vm323, %v700, 0.0
      %702 = vadd.xlane.f32.xlu0 %v701
      %v703 = vpop.xlane.xlu0 %702
      %v704 = vrcp.pop %v703
      %v705 = vmul.f32 %v700, %v704
      %v706 = vpack.c.bf16 %v705, %v705
      %v708 = vsel %vm323, %v706, 0
      %710 = vmatprep.subr.bf16.mxu0 0
      %711 = vmatpush1.bf16.msra.mxu0 0
      %712 = vmatprep.subr.bf16.mxu0 0
      %713 = vmatpush1.bf16.msra.mxu0 0
      %714 = vmatprep.subr.bf16.mxu0 0
      %715 = vmatpush1.bf16.msra.mxu0 0
      %716 = vmatprep.subr.bf16.mxu0 0
      %717 = vmatpush1.bf16.msra.mxu0 0
      %718 = vmatprep.subr.bf16.mxu0 0
      %719 = vmatpush1.bf16.msra.mxu0 0
      %720 = vmatprep.subr.bf16.mxu0 0
      %721 = vmatpush1.bf16.msra.mxu0 0
      %722 = vmatprep.subr.bf16.mxu0 0
      %723 = vmatpush1.bf16.msra.mxu0 0
      %724 = vmatprep.subr.bf16.mxu0 0
      %725 = vmatpush1.bf16.msra.mxu0 %v603
      %726 = vmatprep.subr.bf16.mxu0 0
      %727 = vmatpush2.bf16.msra.mxu0 0
      %728 = vmatprep.subr.bf16.mxu0 0
      %729 = vmatpush2.bf16.msra.mxu0 0
      %730 = vmatprep.subr.bf16.mxu0 0
      %731 = vmatpush2.bf16.msra.mxu0 0
      %732 = vmatprep.subr.bf16.mxu0 0
      %733 = vmatpush2.bf16.msra.mxu0 0
      %734 = vmatprep.subr.bf16.mxu0 0
      %735 = vmatpush2.bf16.msra.mxu0 0
      %736 = vmatprep.subr.bf16.mxu0 0
      %737 = vmatpush2.bf16.msra.mxu0 0
      %738 = vmatprep.subr.bf16.mxu0 0
      %739 = vmatpush2.bf16.msra.mxu0 0
      %740 = vmatprep.subr.bf16.mxu0 0
      %741 = vmatpush2.bf16.msra.mxu0 0
      %742 = vmatprep.mubr.bf16.mxu0 0
      %743 = vmatmul.mubr.bf16.gmra.mxu0 %v708
      %v744 = vpop.f32.mrf.mxu0
      %v745 = vadd.f32 0.0, %v744
      %v746 = vpop.f32.mrf.mxu0
      %v747 = vpop.f32.mrf.mxu0
      %v748 = vpop.f32.mrf.mxu0
      %749 = vdwg.mxu0
      %751 = vrot.lane.b32.xlu0 %v533, 16
      %v752 = vpop.permute.xlu0 %751
      %755 = vrot.lane.b32.xlu0 %v643, 32
      %v756 = vpop.permute.xlu0 %755
      %759 = vrot.lane.b32.xlu0 %v745, 48
      %v760 = vpop.permute.xlu0 %759
      %v762 = vsel %vm323, %v428, %v752
      %vm763 = vcmask 261120
      %v764 = vsel %vm763, %v762, %v756
      %vm765 = vcmask 392192
      %v766 = vsel %vm765, %v764, %v760
      %v767 = vpack.c.bf16 %v766, %v766
      %v768 = vld [vmem:[%s4] sm:$0xf]
      %v769 = vld [vmem:[%s4 + $0x4] sm:$0xf]
      %v770 = vld [vmem:[%s4 + $0x8] sm:$0xf]
      %v771 = vld [vmem:[%s4 + $0xc] sm:$0xf]
      %v772 = vld [vmem:[%s4 + $0x10] sm:$0xf]
      %v773 = vld [vmem:[%s4 + $0x14] sm:$0xf]
      %v774 = vld [vmem:[%s4 + $0x18] sm:$0xf]
      %v775 = vld [vmem:[%s4 + $0x1c] sm:$0xf]
      %v776 = vld [vmem:[%s299] sm:$0xf]
      %v777 = vunpack.c.l.bf16 %v776
      %v786 = vunpack.c.l.b16 %v768
      %v787 = vunpack.c.l.b16 %v769
      %v788 = vunpack.c.l.b16 %v770
      %v789 = vunpack.c.l.b16 %v771
      %v790 = vunpack.c.l.b16 %v772
      %v791 = vunpack.c.l.b16 %v773
      %v792 = vunpack.c.l.b16 %v774
      %v793 = vunpack.c.l.b16 %v775
      %v794 = vpack.c.b16 %v787, %v786
      %v795 = vpack.c.b16 %v789, %v788
      %v796 = vpack.c.b16 %v791, %v790
      %v797 = vpack.c.b16 %v793, %v792
      %vm802 = vcmask 523264
      %v804 = vsel %vm802, %v767, 0
      %806 = vmatprep.subr.bf16.mxu0 0
      %807 = vmatpush1.bf16.msra.mxu0 0
      %808 = vmatprep.subr.bf16.mxu0 0
      %809 = vmatpush1.bf16.msra.mxu0 0
      %810 = vmatprep.subr.bf16.mxu0 0
      %811 = vmatpush1.bf16.msra.mxu0 0
      %812 = vmatprep.subr.bf16.mxu0 0
      %813 = vmatpush1.bf16.msra.mxu0 0
      %814 = vmatprep.subr.bf16.mxu0 0
      %815 = vmatpush1.bf16.msra.mxu0 %v797
      %816 = vmatprep.subr.bf16.mxu0 0
      %817 = vmatpush1.bf16.msra.mxu0 %v796
      %818 = vmatprep.subr.bf16.mxu0 0
      %819 = vmatpush1.bf16.msra.mxu0 %v795
      %820 = vmatprep.subr.bf16.mxu0 0
      %821 = vmatpush1.bf16.msra.mxu0 %v794
      %822 = vmatprep.subr.bf16.mxu0 0
      %823 = vmatpush2.bf16.msra.mxu0 0
      %824 = vmatprep.subr.bf16.mxu0 0
      %825 = vmatpush2.bf16.msra.mxu0 0
      %826 = vmatprep.subr.bf16.mxu0 0
      %827 = vmatpush2.bf16.msra.mxu0 0
      %828 = vmatprep.subr.bf16.mxu0 0
      %829 = vmatpush2.bf16.msra.mxu0 0
      %830 = vmatprep.subr.bf16.mxu0 0
      %831 = vmatpush2.bf16.msra.mxu0 0
      %832 = vmatprep.subr.bf16.mxu0 0
      %833 = vmatpush2.bf16.msra.mxu0 0
      %834 = vmatprep.subr.bf16.mxu0 0
      %835 = vmatpush2.bf16.msra.mxu0 0
      %836 = vmatprep.subr.bf16.mxu0 0
      %837 = vmatpush2.bf16.msra.mxu0 0
      %838 = vmatprep.mubr.bf16.mxu0 0
      %839 = vmatmul.mubr.bf16.gmra.mxu0 %v804
      %v840 = vpop.f32.mrf.mxu0
      %v841 = vadd.f32 %v777, %v840
      %v842 = vpop.f32.mrf.mxu0
      %v843 = vpop.f32.mrf.mxu0
      %v844 = vpop.f32.mrf.mxu0
      %845 = vdwg.mxu0
      %v846 = vpack.c.bf16 %v841, %v841
      %vm847 = vcmask 257024
      %848 = vst.msk [vmem:[%s303] sm:$0xf] %vm847, %v846
      %p849 = scmp.lt.s32.totalorder %s17, 1
      %s850 = scalar_select %p849, %s17, 1
      %s851 = smul.addr %s850, 4
      %s852 = scalar_lea.vmem %s6, %s851
      // Predicated region
      $region45: #{gemma_forward.8} parent=43 // pred_check
        %p853 = pneg %p181
      $region46: #{gemma_forward.8} parent=43 // pred_check_branch
        %855 = sbr.rel (%p853) target = $region48
      $region47: #{gemma_forward.8} parent=43 // pred_region
        _
      $region48: #{gemma_forward.8} parent=43 // pred_fallthru
        _
    $region44: #{gemma_forward.8} parent=5 // pred_fallthru
      _
    %p856 = scmp.le.s32.totalorder 2, %s12
    // Predicated region
    $region49: #{gemma_forward.8} parent=5 // pred_check
      %p857 = pneg %p856
    $region50: #{gemma_forward.8} parent=5 // pred_check_branch
      %859 = sbr.rel (%p857) target = $region52
    $region51: #{gemma_forward.8} parent=5 // pred_region
      %s860 = ssub.s32 %s12, 2
      // Predicated region
      $region53: #{gemma_forward.8} parent=51 // pred_check
        %p861 = pneg %p187
      $region54: #{gemma_forward.8} parent=51 // pred_check_branch
        %863 = sbr.rel (%p861) target = $region56
      $region55: #{gemma_forward.8} parent=51 // pred_region
        %p864 = scmp.lt.s32.totalorder %s18, 1
        %s865 = scalar_select %p864, %s18, 1
        %s866 = smul.addr %s865, 4
        %s867 = scalar_lea.vmem %s6, %s866
      $region56: #{gemma_forward.8} parent=51 // pred_fallthru
        _
    $region52: #{gemma_forward.8} parent=5 // pred_fallthru
      _
  $region6: #{gemma_forward.8} parent=0 // loop_footer
    %s16 = sadd.s32 1, %s12
  $region7: #{gemma_forward.8} parent=0 // loop_footer_branch
    %11 = sbr.rel target = $region3
  $region8: #{gemma_forward.8} parent=0 // loop_exit
    _

// kernel: gemma_forward.13
$region0: #{gemma_forward.13}
  #allocation0 [shape = 'u32[]', space=smem, size = 0x4, offset = 0x4, fixed_abs, tag = 'smem constant byte address 0x4 - core index']
  #allocation1 [shape = 'u32[144,128]{1,0:T(1,128)}', space=vmem, size = 0x12000, scoped, tag = 'internal scratch']
  %s0 = inlined_call_operand.vmem [shape: bf16[2,32], index: 0, kind: input, shape index: {}]
  %s1 = inlined_call_operand.vmem [shape: bf16[1,32], index: 1, kind: input, shape index: {}]
  %s2 = inlined_call_operand.vmem [shape: bf16[32,256], index: 2, kind: input, shape index: {}]
  %s3 = inlined_call_operand.vmem [shape: f32[2,256], index: 3, kind: output, shape index: {}]
  %s4 = sld [smem:[#allocation0]]
  $region86: #{gemma_forward.13} parent=0
    _
  %s6 = ssub.s32 1, %s4
  %s7 = scalar_select 0, %s6, %s4
  $region1: #{gemma_forward.13} parent=0
    #allocation2 [shape = 'u8[16384]{0}', space=vmem, size = 0x4000, scoped, tag = 'input window, operand 2']
    loop: start=0, step=1, limit=4
    $region2: #{gemma_forward.13} parent=1 // loop_pre_header
      _
    $region3: #{gemma_forward.13} parent=1 // loop_header
      %s9 = sphi 0, %s13
      %p10 = scmp.ge.s32.totalorder %s9, 4
      %s16 = sphi 0, %s28
      %s17 = sphi 0, %s24
      %s18 = sphi 0, %s16
      %s19 = sphi 0, %s17
      %s20 = sphi 0, %s18
      %s21 = sphi 0, %s19
      %s31 = sphi 0, %s33
      %s34 = sphi 0, %s31
      %s35 = sphi 0, %s34
      %s51 = sphi 0, %s35
      %s55 = sphi 0, %s55
      %s57 = sphi 0, %s55
      %s58 = sphi 0, %s57
      %s72 = sphi 0, %s58
      %s78 = sphi 0, %s80
      %s81 = sphi 0, %s78
      %s82 = sphi 0, %s81
      %s98 = sphi 0, %s82
      %s106 = sphi 0, %s108
      %s109 = sphi 0, %s106
      %s110 = sphi 0, %s109
      %s126 = sphi 0, %s110
    $region4: #{gemma_forward.13} parent=1 // loop_header_branch
      %12 = sbr.rel (%p10) target = $region8
    $region5: #{gemma_forward.13} parent=1 // loop_body
      %s14 = ssub.s32 %s9, 1
      %s15 = ssub.s32 %s9, 2
      %s22 = sadd.s32 1, %s17
      %p23 = scmp.ge.s32.totalorder %s22, 2
      %s24 = scalar_select %p23, 0, %s22
      %s25 = sadd.s32 1, %s16
      %s26 = scalar_select %p23, %s25, %s16
      %p27 = scmp.ge.s32.totalorder %s26, 1
      %s28 = scalar_select %p27, 0, %s26
      %s29 = ssub.s32 %s16, %s28
      %p30 = scmp.eq.s32.totalorder %s29, 0
      %s32 = sadd.s32 %s31, 1
      %s33 = scalar_select %p30, %s31, %s32
      %p36 = pneg %p30
      %p37 = scmp.eq.s32.totalorder %s9, 1
      %p38 = por %p36, %p37
      %p39 = scmp.ne.s32.totalorder %s31, %s34
      %p40 = scmp.eq.s32.totalorder %s9, 0
      %p41 = por %p39, %p40
      %p42 = scmp.ne.s32.totalorder %s31, %s34
      %p43 = scmp.eq.s32.totalorder %s14, 1
      %p44 = por %p42, %p43
      %p45 = scmp.ne.s32.totalorder %s34, %s35
      %p46 = scmp.eq.s32.totalorder %s14, 0
      %p47 = por %p45, %p46
      %p48 = scmp.ne.s32.totalorder %s34, %s35
      %p49 = scmp.eq.s32.totalorder %s15, 1
      %p50 = por %p48, %p49
      %p52 = scmp.ne.s32.totalorder %s35, %s51
      %p53 = scmp.eq.s32.totalorder %s15, 0
      %p54 = por %p52, %p53
      %s56 = sadd.s32 %s55, 1
      %p59 = scmp.eq.s32.totalorder %s9, 1
      %p60 = scmp.ne.s32.totalorder %s55, %s57
      %p61 = scmp.eq.s32.totalorder %s9, 0
      %p62 = por %p60, %p61
      %p63 = scmp.ne.s32.totalorder %s55, %s57
      %p64 = scmp.eq.s32.totalorder %s14, 1
      %p65 = por %p63, %p64
      %p66 = scmp.ne.s32.totalorder %s57, %s58
      %p67 = scmp.eq.s32.totalorder %s14, 0
      %p68 = por %p66, %p67
      %p69 = scmp.ne.s32.totalorder %s57, %s58
      %p70 = scmp.eq.s32.totalorder %s15, 1
      %p71 = por %p69, %p70
      %p73 = scmp.ne.s32.totalorder %s58, %s72
      %p74 = scmp.eq.s32.totalorder %s15, 0
      %p75 = por %p73, %p74
      %s76 = ssub.s32 %s17, %s24
      %p77 = scmp.eq.s32.totalorder %s76, 0
      %s79 = sadd.s32 %s78, 1
      %s80 = scalar_select %p77, %s78, %s79
      %p83 = pneg %p77
      %p84 = scmp.eq.s32.totalorder %s9, 1
      %p85 = por %p83, %p84
      %p86 = scmp.ne.s32.totalorder %s78, %s81
      %p87 = scmp.eq.s32.totalorder %s9, 0
      %p88 = por %p86, %p87
      %p89 = scmp.ne.s32.totalorder %s78, %s81
      %p90 = scmp.eq.s32.totalorder %s14, 1
      %p91 = por %p89, %p90
      %p92 = scmp.ne.s32.totalorder %s81, %s82
      %p93 = scmp.eq.s32.totalorder %s14, 0
      %p94 = por %p92, %p93
      %p95 = scmp.ne.s32.totalorder %s81, %s82
      %p96 = scmp.eq.s32.totalorder %s15, 1
      %p97 = por %p95, %p96
      %p99 = scmp.ne.s32.totalorder %s82, %s98
      %p100 = scmp.eq.s32.totalorder %s15, 0
      %p101 = por %p99, %p100
      %s102 = ssub.s32 %s16, %s28
      %s103 = ssub.s32 %s17, %s24
      %s104 = sor.u32 %s102, %s103
      %p105 = scmp.eq.s32.totalorder %s104, 0
      %s107 = sadd.s32 %s106, 1
      %s108 = scalar_select %p105, %s106, %s107
      %p111 = pneg %p105
      %p112 = scmp.eq.s32.totalorder %s9, 1
      %p113 = por %p111, %p112
      %p114 = scmp.ne.s32.totalorder %s106, %s109
      %p115 = scmp.eq.s32.totalorder %s9, 0
      %p116 = por %p114, %p115
      %p117 = scmp.ne.s32.totalorder %s106, %s109
      %p118 = scmp.eq.s32.totalorder %s14, 1
      %p119 = por %p117, %p118
      %p120 = scmp.ne.s32.totalorder %s109, %s110
      %p121 = scmp.eq.s32.totalorder %s14, 0
      %p122 = por %p120, %p121
      %p123 = scmp.ne.s32.totalorder %s109, %s110
      %p124 = scmp.eq.s32.totalorder %s15, 1
      %p125 = por %p123, %p124
      %p127 = scmp.ne.s32.totalorder %s110, %s126
      %p128 = scmp.eq.s32.totalorder %s15, 0
      %p129 = por %p127, %p128
      %p130 = scmp.le.s32.totalorder 1, %s9
      %p131 = scmp.lt.s32.totalorder %s9, 3
      %p132 = pnand %p130, %p131
      %p133 = pneg %p132
      // Predicated region
      $region9: #{gemma_forward.13} parent=5 // pred_check
        _
      $region10: #{gemma_forward.13} parent=5 // pred_check_branch
        %135 = sbr.rel (%p132) target = $region12
      $region11: #{gemma_forward.13} parent=5 // pred_region
        %s136 = ssub.s32 %s9, 1
        // Predicated region
        $region13: #{gemma_forward.13} parent=11 // pred_check
          %p137 = pneg %p47
        $region14: #{gemma_forward.13} parent=11 // pred_check_branch
          %139 = sbr.rel (%p137) target = $region16
        $region15: #{gemma_forward.13} parent=11 // pred_region
          %p140 = scmp.lt.s32.totalorder %s18, 0
          %s141 = scalar_select %p140, %s18, 0
          %s142 = scalar_lea.vmem %s0, %s141
        $region16: #{gemma_forward.13} parent=11 // pred_fallthru
          _
        // Predicated region
        $region17: #{gemma_forward.13} parent=11 // pred_check
          %p143 = pneg %p68
        $region18: #{gemma_forward.13} parent=11 // pred_check_branch
          %145 = sbr.rel (%p143) target = $region20
        $region19: #{gemma_forward.13} parent=11 // pred_region
          _
        $region20: #{gemma_forward.13} parent=11 // pred_fallthru
          _
      $region12: #{gemma_forward.13} parent=5 // pred_fallthru
        _
      %p146 = scmp.lt.s32.totalorder %s9, 2
      // Predicated region
      $region21: #{gemma_forward.13} parent=5 // pred_check
        %p147 = pneg %p146
      $region22: #{gemma_forward.13} parent=5 // pred_check_branch
        %149 = sbr.rel (%p147) target = $region24
      $region23: #{gemma_forward.13} parent=5 // pred_region
        // Predicated region
        $region25: #{gemma_forward.13} parent=23 // pred_check
          %p150 = pneg %p88
        $region26: #{gemma_forward.13} parent=23 // pred_check_branch
          %152 = sbr.rel (%p150) target = $region28
        $region27: #{gemma_forward.13} parent=23 // pred_region
          %s153 = sand.u32 %s78, 1
          %s154 = sand.u32 %s78, 1
          %s155 = smul.addr %s154, 16
          %s156 = scalar_lea.vmem [#allocation2], %s155
          %s157 = smul.addr %s17, 4
          %s158 = scalar_lea.vmem %s2, %s157
          // Predicated region
          $region29: #{gemma_forward.13} parent=27 // pred_check
            _
          $region30: #{gemma_forward.13} parent=27 // pred_check_branch
            %160 = sbr.rel (0) target = $region32
          $region31: #{gemma_forward.13} parent=27 // pred_region
            // Predicated region
            $region33: #{gemma_forward.13} parent=31 // pred_check
              _
            $region34: #{gemma_forward.13} parent=31 // pred_check_branch
              %162 = sbr.rel target = $region36
            $region35: #{gemma_forward.13} parent=31 // pred_region
              // Predicated region
              $region48: #{gemma_forward.13} parent=35 // pred_check
                _
              $region49: #{gemma_forward.13} parent=35 // pred_check_branch
                %184 = sbr.rel (0) target = $region51
              $region50: #{gemma_forward.13} parent=35 // pred_region
                loop: start=0, step=1, limit=1
                $region52: #{gemma_forward.13} parent=50 // loop_pre_header
                  _
                $region53: #{gemma_forward.13} parent=50 // loop_header
                  %s186 = sphi 0, %s190
                  %p187 = scmp.ge.s32.totalorder %s186, 1
                  %s191 = sphi %s158, %s158
                  %s192 = sphi %s156, %s156
                $region54: #{gemma_forward.13} parent=50 // loop_header_branch
                  %189 = sbr.rel (%p187) target = $region58
                $region55: #{gemma_forward.13} parent=50 // loop_body
                  _
                $region56: #{gemma_forward.13} parent=50 // loop_footer
                  %s190 = sadd.s32 1, %s186
                $region57: #{gemma_forward.13} parent=50 // loop_footer_branch
                  %185 = sbr.rel target = $region53
                $region58: #{gemma_forward.13} parent=50 // loop_exit
                  _
                %s194 = ssub.s32 16, 1
                loop: start=0, step=1, limit=1
                $region59: #{gemma_forward.13} parent=50 // loop_pre_header
                  _
                $region60: #{gemma_forward.13} parent=50 // loop_header
                  %s196 = sphi 0, %s200
                  %p197 = scmp.ge.s32.totalorder %s196, 1
                  %s201 = sphi %s158, %s158
                  %s202 = sphi %s156, %s156
                $region61: #{gemma_forward.13} parent=50 // loop_header_branch
                  %199 = sbr.rel (%p197) target = $region65
                $region62: #{gemma_forward.13} parent=50 // loop_body
                  %v203 = vld [vmem:[%s201] sm:%s194]
                  %204 = vst [vmem:[%s202] sm:%s194] %v203
                  %v205 = vld [vmem:[%s201 + $0x8] sm:%s194]
                  %206 = vst [vmem:[%s202 + $0x4] sm:%s194] %v205
                  %v207 = vld [vmem:[%s201 + $0x10] sm:%s194]
                  %208 = vst [vmem:[%s202 + $0x8] sm:%s194] %v207
                  %v209 = vld [vmem:[%s201 + $0x18] sm:%s194]
                  %210 = vst [vmem:[%s202 + $0xc] sm:%s194] %v209
                $region63: #{gemma_forward.13} parent=50 // loop_footer
                  %s200 = sadd.s32 1, %s196
                $region64: #{gemma_forward.13} parent=50 // loop_footer_branch
                  %195 = sbr.rel target = $region60
                $region65: #{gemma_forward.13} parent=50 // loop_exit
                  _
              $region51: #{gemma_forward.13} parent=35 // pred_fallthru
                _
            $region36: #{gemma_forward.13} parent=31 // pred_fallthru
              _
            // Predicated region
            $region37: #{gemma_forward.13} parent=31 // pred_check
              _
            $region38: #{gemma_forward.13} parent=31 // pred_check_branch
              %164 = sbr.rel (0) target = $region40
            $region39: #{gemma_forward.13} parent=31 // pred_region
              %s166 = ssub.s32 16, 1
              loop: start=0, step=1, limit=1
              $region41: #{gemma_forward.13} parent=39 // loop_pre_header
                _
              $region42: #{gemma_forward.13} parent=39 // loop_header
                %s168 = sphi 0, %s172
                %p169 = scmp.ge.s32.totalorder %s168, 1
                %s173 = sphi %s158, %s158
                %s174 = sphi %s156, %s156
              $region43: #{gemma_forward.13} parent=39 // loop_header_branch
                %171 = sbr.rel (%p169) target = $region47
              $region44: #{gemma_forward.13} parent=39 // loop_body
                %v175 = vld [vmem:[%s173] sm:%s166]
                %176 = vst [vmem:[%s174] sm:%s166] %v175
                %v177 = vld [vmem:[%s173 + $0x8] sm:%s166]
                %178 = vst [vmem:[%s174 + $0x4] sm:%s166] %v177
                %v179 = vld [vmem:[%s173 + $0x10] sm:%s166]
                %180 = vst [vmem:[%s174 + $0x8] sm:%s166] %v179
                %v181 = vld [vmem:[%s173 + $0x18] sm:%s166]
                %182 = vst [vmem:[%s174 + $0xc] sm:%s166] %v181
              $region45: #{gemma_forward.13} parent=39 // loop_footer
                %s172 = sadd.s32 1, %s168
              $region46: #{gemma_forward.13} parent=39 // loop_footer_branch
                %167 = sbr.rel target = $region42
              $region47: #{gemma_forward.13} parent=39 // loop_exit
                _
            $region40: #{gemma_forward.13} parent=31 // pred_fallthru
              _
          $region32: #{gemma_forward.13} parent=27 // pred_fallthru
            _
          %211 = vnop
        $region28: #{gemma_forward.13} parent=23 // pred_fallthru
          _
      $region24: #{gemma_forward.13} parent=5 // pred_fallthru
        _
      %p212 = scmp.le.s32.totalorder 1, %s9
      %p213 = scmp.lt.s32.totalorder %s9, 3
      %p214 = pnand %p212, %p213
      %p215 = pneg %p214
      // Predicated region
      $region66: #{gemma_forward.13} parent=5 // pred_check
        _
      $region67: #{gemma_forward.13} parent=5 // pred_check_branch
        %217 = sbr.rel (%p214) target = $region69
      $region68: #{gemma_forward.13} parent=5 // pred_region
        %s218 = ssub.s32 %s9, 1
        %s219 = sand.u32 %s81, 1
        %s220 = sand.u32 %s81, 1
        %s221 = smul.addr %s220, 16
        %s222 = scalar_lea.vmem [#allocation2], %s221
        // Predicated region
        $region70: #{gemma_forward.13} parent=68 // pred_check
          %p223 = pneg %p94
        $region71: #{gemma_forward.13} parent=68 // pred_check_branch
          %225 = sbr.rel (%p223) target = $region73
        $region72: #{gemma_forward.13} parent=68 // pred_region
          _
        $region73: #{gemma_forward.13} parent=68 // pred_fallthru
          _
        %p226 = scmp.lt.s32.totalorder %s18, 0
        %s227 = scalar_select %p226, %s18, 0
        %s228 = scalar_lea.vmem %s0, %s227
        %p229 = pneg %p47
        %p230 = pneg %p44
        %p231 = pneg %p68
        %p232 = pneg %p65
        %s233 = sand.u32 %s81, 1
        %s234 = sand.u32 %s81, 1
        %s235 = smul.addr %s234, 16
        %s236 = scalar_lea.vmem [#allocation2], %s235
        %p237 = pneg %p94
        %p238 = pneg %p91
        %p239 = pneg %p122
        %p240 = pneg %p119
        %p241 = scmp.lt.s32.totalorder %s18, 0
        %s242 = scalar_select %p241, %s18, 0
        %p243 = scmp.lt.s32.totalorder %s19, 1
        %s244 = scalar_select %p243, %s19, 1
        %s245 = smul.addr %s242, 2
        %s246 = sadd.s32 %s244, %s245
        %s247 = smul.addr %s246, 2
        %s248 = scalar_lea.vmem %s3, %s247
        %p249 = scmp.lt.s32.totalorder %s18, 0
        %s250 = scalar_select %p249, %s18, 0
        %s251 = scalar_lea.vmem %s0, %s250
        %p252 = scmp.lt.s32.totalorder %s18, 0
        %s253 = scalar_select %p252, %s18, 0
        %p254 = scmp.lt.s32.totalorder %s19, 1
        %s255 = scalar_select %p254, %s19, 1
        %s256 = smul.addr %s253, 2
        %s257 = sadd.s32 %s255, %s256
        %s258 = smul.addr %s257, 2
        %s259 = scalar_lea.vmem %s3, %s258
        %v261 = vld [vmem:[%s251] sm:$0x1]
        %v262 = vunpack.c.l.bf16 %v261
        %v263 = vmul.f32 %v262, %v262
        %vm264 = vcmask 254976
        %v265 = vsel %vm264, %v263, 0.0
        %266 = vadd.xlane.f32.xlu0 %v265
        %v267 = vpop.xlane.xlu0 %266
        %v268 = vrcp.pop 32.0
        %v269 = vmul.f32 %v267, %v268
        %v270 = vadd.f32 %v269, 1e-06
        %v271 = vrsqrt.pop %v270
        %v272 = vmul.f32 %v262, %v271
        %v273 = vld [vmem:[%s1] sm:$0x1]
        %v274 = vunpack.c.l.bf16 %v273
        %v275 = vadd.f32 %v274, 1.0
        %v276 = vlaneseq
        %v277 = vshrl.u32 %v276, 7
        %v278 = vsub.s32 0, %v277
        %v279 = vrot.slane %v275, %v278
        %v280 = vmul.f32 %v272, %v279
        %v281 = vpack.c.bf16 %v280, %v280
        %v282 = vld [vmem:[%s222] sm:$0xf]
        %v283 = vld [vmem:[%s222 + $0x4] sm:$0xf]
        %v284 = vld [vmem:[%s222 + $0x8] sm:$0xf]
        %v285 = vld [vmem:[%s222 + $0xc] sm:$0xf]
        %v290 = vunpack.c.l.b16 %v282
        %v291 = vunpack.c.l.b16 %v283
        %v292 = vunpack.c.l.b16 %v284
        %v293 = vunpack.c.l.b16 %v285
        %v294 = vpack.c.b16 %v291, %v290
        %v295 = vpack.c.b16 %v293, %v292
        %vm298 = vcmask 261120
        %v300 = vsel %vm298, %v281, 0
        %302 = vmatprep.subr.bf16.mxu0 0
        %303 = vmatpush1.bf16.msra.mxu0 0
        %304 = vmatprep.subr.bf16.mxu0 0
        %305 = vmatpush1.bf16.msra.mxu0 0
        %306 = vmatprep.subr.bf16.mxu0 0
        %307 = vmatpush1.bf16.msra.mxu0 0
        %308 = vmatprep.subr.bf16.mxu0 0
        %309 = vmatpush1.bf16.msra.mxu0 0
        %310 = vmatprep.subr.bf16.mxu0 0
        %311 = vmatpush1.bf16.msra.mxu0 0
        %312 = vmatprep.subr.bf16.mxu0 0
        %313 = vmatpush1.bf16.msra.mxu0 0
        %314 = vmatprep.subr.bf16.mxu0 0
        %315 = vmatpush1.bf16.msra.mxu0 %v295
        %316 = vmatprep.subr.bf16.mxu0 0
        %317 = vmatpush1.bf16.msra.mxu0 %v294
        %318 = vmatprep.subr.bf16.mxu0 0
        %319 = vmatpush2.bf16.msra.mxu0 0
        %320 = vmatprep.subr.bf16.mxu0 0
        %321 = vmatpush2.bf16.msra.mxu0 0
        %322 = vmatprep.subr.bf16.mxu0 0
        %323 = vmatpush2.bf16.msra.mxu0 0
        %324 = vmatprep.subr.bf16.mxu0 0
        %325 = vmatpush2.bf16.msra.mxu0 0
        %326 = vmatprep.subr.bf16.mxu0 0
        %327 = vmatpush2.bf16.msra.mxu0 0
        %328 = vmatprep.subr.bf16.mxu0 0
        %329 = vmatpush2.bf16.msra.mxu0 0
        %330 = vmatprep.subr.bf16.mxu0 0
        %331 = vmatpush2.bf16.msra.mxu0 0
        %332 = vmatprep.subr.bf16.mxu0 0
        %333 = vmatpush2.bf16.msra.mxu0 0
        %334 = vmatprep.mubr.bf16.mxu0 0
        %335 = vmatmul.mubr.bf16.gmra.mxu0 %v300
        %v336 = vpop.f32.mrf.mxu0
        %v337 = vadd.f32 0.0, %v336
        %v338 = vpop.f32.mrf.mxu0
        %v339 = vpop.f32.mrf.mxu0
        %v340 = vpop.f32.mrf.mxu0
        %341 = vdwg.mxu0
        %342 = vst [vmem:[%s259] sm:$0x3] %v337
        %p343 = scmp.lt.s32.totalorder %s18, 0
        %s344 = scalar_select %p343, %s18, 0
        %p345 = scmp.lt.s32.totalorder %s19, 1
        %s346 = scalar_select %p345, %s19, 1
        %s347 = smul.addr %s344, 2
        %s348 = sadd.s32 %s346, %s347
        %s349 = smul.addr %s348, 2
        %s350 = scalar_lea.vmem %s3, %s349
        // Predicated region
        $region74: #{gemma_forward.13} parent=68 // pred_check
          %p351 = pneg %p119
        $region75: #{gemma_forward.13} parent=68 // pred_check_branch
          %353 = sbr.rel (%p351) target = $region77
        $region76: #{gemma_forward.13} parent=68 // pred_region
          _
        $region77: #{gemma_forward.13} parent=68 // pred_fallthru
          _
      $region69: #{gemma_forward.13} parent=5 // pred_fallthru
        _
      %p354 = scmp.le.s32.totalorder 2, %s9
      // Predicated region
      $region78: #{gemma_forward.13} parent=5 // pred_check
        %p355 = pneg %p354
      $region79: #{gemma_forward.13} parent=5 // pred_check_branch
        %357 = sbr.rel (%p355) target = $region81
      $region80: #{gemma_forward.13} parent=5 // pred_region
        %s358 = ssub.s32 %s9, 2
        // Predicated region
        $region82: #{gemma_forward.13} parent=80 // pred_check
          %p359 = pneg %p125
        $region83: #{gemma_forward.13} parent=80 // pred_check_branch
          %361 = sbr.rel (%p359) target = $region85
        $region84: #{gemma_forward.13} parent=80 // pred_region
          %p362 = scmp.lt.s32.totalorder %s20, 0
          %s363 = scalar_select %p362, %s20, 0
          %p364 = scmp.lt.s32.totalorder %s21, 1
          %s365 = scalar_select %p364, %s21, 1
          %s366 = smul.addr %s363, 2
          %s367 = sadd.s32 %s365, %s366
          %s368 = smul.addr %s367, 2
          %s369 = scalar_lea.vmem %s3, %s368
        $region85: #{gemma_forward.13} parent=80 // pred_fallthru
          _
      $region81: #{gemma_forward.13} parent=5 // pred_fallthru
        _
    $region6: #{gemma_forward.13} parent=1 // loop_footer
      %s13 = sadd.s32 1, %s9
    $region7: #{gemma_forward.13} parent=1 // loop_footer_branch
      %8 = sbr.rel target = $region3
    $region8: #{gemma_forward.13} parent=1 // loop_exit
      _

</llo_original>
